<compile_context>
chip_gen: v6e
topology: v6e:2x2x1
jax: 0.10.0
libtpu: 0.0.40
codegen_flags: <defaults>
</compile_context>

<pallas_src>
import functools

import jax
import jax.numpy as jnp
from jax.experimental import pallas as pl
from jax.experimental.pallas import tpu as pltpu


_TAPS = tuple((dy, dx) for dy in (-1, 0, 1) for dx in (-1, 0, 1))


def _self_attention_kernel(feat_ref, mask_ref, w1_ref, wd_ref, w2_ref, b_ref,
                           out_ref, *, H, W, C):
    """Process one batch block.

    feat_ref : (Nb, C, H*W)  VMEM   feature, flat spatial (lane-dense)
    mask_ref : (Nb, 1, H*W)  VMEM   mask
    w1_ref   : (Cin*9,) SMEM  conv1 weight   (index c*9 + (dy+1)*3 + (dx+1))
    wd_ref   : (Cin*9,) SMEM  downsample weight
    w2_ref   : (9,)     SMEM  conv2 weight
    b_ref    : (3,)     SMEM  [b1, b2, b_down]
    out_ref  : (Nb, C, H*W)
    """
    HW = H * W
    cin = C + 1

    feat = feat_ref[...].astype(jnp.float32)        # (Nb, C, HW)
    msk = mask_ref[:, 0, :].astype(jnp.float32)     # (Nb, HW)
    nb = feat.shape[0]

    # --- per-tap border masks (hoisted: computed once per grid step, reused for
    # --- all channels of conv1/downsample and for conv2). Zero padding of the
    # --- 3x3 convs == roll + mask; no padded buffers, no misaligned slices.
    lane = jax.lax.broadcasted_iota(jnp.int32, (1, HW), 1)
    if (W & (W - 1)) == 0:                       # power of two: avoid vector int div
        h_idx = jnp.right_shift(lane, W.bit_length() - 1)
        w_idx = jnp.bitwise_and(lane, W - 1)
    else:
        h_idx = lane // W
        w_idx = lane % W

    tap_mask = {}
    for (dy, dx) in _TAPS:
        if dy == 0 and dx == 0:
            continue
        ok = ((h_idx + dy >= 0) & (h_idx + dy < H)
              & (w_idx + dx >= 0) & (w_idx + dx < W))
        tap_mask[(dy, dx)] = ok.astype(jnp.float32)          # (1, HW)

    def shifted(x, dy, dx):
        # x[n, i] -> x[n, i + dy*W + dx]; positions whose tap reads outside the
        # image are zeroed (== zero padding). pltpu.roll has jnp.roll semantics,
        # so the wrap-around lanes are exactly the masked ones.
        s = dy * W + dx
        if s == 0:
            return x
        rolled = pltpu.roll(x, (-s) % HW, axis=1)
        return rolled * tap_mask[(dy, dx)]

    b1 = b_ref[0]
    b2 = b_ref[1]
    bd = b_ref[2]

    acc1 = jnp.zeros((nb, HW), jnp.float32)
    accd = jnp.zeros((nb, HW), jnp.float32)

    # conv1(relu(x)) and downsample(x): one shifted window per (channel, tap)
    # feeds both accumulators.
    for c in range(cin):
        xc = feat[:, c, :] if c < C else msk                 # (Nb, HW)
        for (dy, dx) in _TAPS:
            sm = shifted(xc, dy, dx)
            idx = c * 9 + (dy + 1) * 3 + (dx + 1)
            acc1 = acc1 + w1_ref[idx] * jnp.maximum(sm, 0.0)
            accd = accd + wd_ref[idx] * sm

    r1 = jnp.maximum(acc1 + b1, 0.0)                         # relu(conv1(relu(x)) + b1)

    # conv2(r1): 3x3, 1 -> 1 channel (same roll+mask padding).
    acc2 = jnp.zeros((nb, HW), jnp.float32)
    for (dy, dx) in _TAPS:
        sm = shifted(r1, dy, dx)
        acc2 = acc2 + w2_ref[(dy + 1) * 3 + (dx + 1)] * sm

    fm = jax.nn.sigmoid((accd + bd) + (acc2 + b2))           # (Nb, HW) attention map
    out_ref[...] = (feat * fm[:, None, :]).astype(out_ref.dtype)


def _pick_batch_block(n):
    # Largest divisor of N that is <= 8: whole batch for small N, 8-deep blocks
    # for large N (amortizes per-grid-step overhead, keeps VMEM tiles tiny).
    for d in range(min(n, 8), 0, -1):
        if n % d == 0:
            return d
    return 1


@jax.jit
def self_attention_pallas(feature, mask, w1, b1, w2, b2, wd, bd):
    """feature: (N, C, H, W), mask: (N, 1, H, W). Returns feature * sigmoid(ResBlock(cat))."""
    N, C, H, W = feature.shape
    HW = H * W
    cin = C + 1

    # Free reshapes (merge the two minor dims; layout-compatible, no HBM copy).
    feat_r = feature.reshape(N, C, HW)
    mask_r = mask.reshape(N, 1, HW)

    w1f = w1.reshape(-1).astype(jnp.float32)                 # (cin*9,)
    wdf = wd.reshape(-1).astype(jnp.float32)                 # (cin*9,)
    w2f = w2.reshape(-1).astype(jnp.float32)                 # (9,)
    bvec = jnp.stack([b1.reshape(()), b2.reshape(()), bd.reshape(())]).astype(jnp.float32)

    nb = _pick_batch_block(N)
    grid = (N // nb,)

    smem = pl.BlockSpec(memory_space=pltpu.MemorySpace.SMEM)
    kernel = functools.partial(_self_attention_kernel, H=H, W=W, C=C)

    itemsize = feature.dtype.itemsize
    flops = N * HW * (4 * cin * 9 + 2 * 9 + C + 8)
    bytes_accessed = (2 * N * C * HW + N * HW) * itemsize + (2 * cin * 9 + 9 + 3) * 4

    out = pl.pallas_call(
        kernel,
        out_shape=jax.ShapeDtypeStruct((N, C, HW), feature.dtype),
        grid_spec=pl.GridSpec(
            grid=grid,
            in_specs=[
                pl.BlockSpec((nb, C, HW), lambda b: (b, 0, 0)),   # feature
                pl.BlockSpec((nb, 1, HW), lambda b: (b, 0, 0)),   # mask
                smem,   # w1
                smem,   # wd
                smem,   # w2
                smem,   # biases
            ],
            out_specs=pl.BlockSpec((nb, C, HW), lambda b: (b, 0, 0)),
        ),
        compiler_params=pltpu.CompilerParams(
            dimension_semantics=("parallel",)),
        cost_estimate=pl.CostEstimate(
            flops=flops, transcendentals=N * HW, bytes_accessed=bytes_accessed),
    )(feat_r, mask_r, w1f, wdf, w2f, bvec)

    return out.reshape(N, C, H, W)


# ----------------------------- pure-JAX reference -----------------------------
def _conv3x3_ref(x, w, b):
    out = jax.lax.conv_general_dilated(
        x, w, window_strides=(1, 1), padding=((1, 1), (1, 1)),
        dimension_numbers=("NCHW", "OIHW", "NCHW"))
    return out + b.reshape(1, -1, 1, 1)


def self_attention_ref(feature, mask, w1, b1, w2, b2, wd, bd):
    x = jnp.concatenate([feature, mask], axis=1)
    r = _conv3x3_ref(jax.nn.relu(x), w1, b1)
    r = _conv3x3_ref(jax.nn.relu(r), w2, b2)
    xd = _conv3x3_ref(x, wd, bd)
    fm = jax.nn.sigmoid(xd + r)
    return feature * fm


if __name__ == "__main__":
    key = jax.random.PRNGKey(0)
    kf, km, k1, k2, k3, k4, k5, k6 = jax.random.split(key, 8)

    N, C, H, W = 2, 4, 16, 16          # embed_dim = 4
    cin = C + 1

    feature = jax.random.normal(kf, (N, C, H, W), jnp.float32)
    mask = jax.random.uniform(km, (N, 1, H, W), jnp.float32)

    # Conv2d parameter shapes from ResBlock(embed_dim + 1, 1).
    scale = 0.1
    w1 = scale * jax.random.normal(k1, (1, cin, 3, 3), jnp.float32)   # conv1
    b1 = scale * jax.random.normal(k2, (1,), jnp.float32)
    w2 = scale * jax.random.normal(k3, (1, 1, 3, 3), jnp.float32)     # conv2
    b2 = scale * jax.random.normal(k4, (1,), jnp.float32)
    wd = scale * jax.random.normal(k5, (1, cin, 3, 3), jnp.float32)   # downsample
    bd = scale * jax.random.normal(k6, (1,), jnp.float32)

    out = self_attention_pallas(feature, mask, w1, b1, w2, b2, wd, bd)
    out = jax.block_until_ready(out)

    ref = self_attention_ref(feature, mask, w1, b1, w2, b2, wd, bd)
    assert out.shape == (N, C, H, W)
    err = float(jnp.max(jnp.abs(out - ref)))
    assert jnp.allclose(out, ref, atol=1e-4, rtol=1e-4), err

    print("KERNEL_OK")
</pallas_src>

<mosaic_0001>
module attributes {stable_mosaic.version = 11 : i64} {
  func.func @_self_attention_kernel(%arg0: i32, %arg1: memref<2x4x256xf32, #tpu.memory_space<vmem>>, %arg2: memref<2x1x256xf32, #tpu.memory_space<vmem>>, %arg3: memref<45xf32, #tpu.memory_space<smem>>, %arg4: memref<45xf32, #tpu.memory_space<smem>>, %arg5: memref<9xf32, #tpu.memory_space<smem>>, %arg6: memref<3xf32, #tpu.memory_space<smem>>, %arg7: memref<2x4x256xf32, #tpu.memory_space<vmem>>) attributes {dimension_semantics = [#tpu.dimension_semantics<parallel>], iteration_bounds = array<i64: 1>, scalar_prefetch = 0 : i64, scratch_operands = 0 : i64, tpu.core_type = #tpu.core_type<tc>, window_params = [{transform_indices = @transform_0, window_bounds = array<i64: 2, 4, 256>}, {transform_indices = @transform_1, window_bounds = array<i64: 2, 1, 256>}, {transform_indices = @transform_2, window_bounds = array<i64: 45>}, {transform_indices = @transform_3, window_bounds = array<i64: 45>}, {transform_indices = @transform_4, window_bounds = array<i64: 9>}, {transform_indices = @transform_5, window_bounds = array<i64: 3>}, {transform_indices = @transform_6, window_bounds = array<i64: 2, 4, 256>}]} {
    %c0 = arith.constant 0 : index
    %c0_0 = arith.constant 0 : index
    %c0_1 = arith.constant 0 : index
    %0 = vector.load %arg1[%c0, %c0_0, %c0_1] : memref<2x4x256xf32, #tpu.memory_space<vmem>>, vector<2x4x256xf32>
    %c0_2 = arith.constant 0 : index
    %c0_3 = arith.constant 0 : index
    %c0_4 = arith.constant 0 : index
    %1 = vector.load %arg2[%c0_2, %c0_3, %c0_4] : memref<2x1x256xf32, #tpu.memory_space<vmem>>, vector<2x1x256xf32>
    %2 = vector.shape_cast %1 : vector<2x1x256xf32> to vector<2x256xf32>
    %3 = tpu.iota {dimensions = array<i32: 1>} : vector<1x256xi32>
    %c4_i32 = arith.constant 4 : i32
    %4 = vector.broadcast %c4_i32 : i32 to vector<1x256xi32>
    %5 = arith.shrsi %3, %4 : vector<1x256xi32>
    %c15_i32 = arith.constant 15 : i32
    %6 = vector.broadcast %c15_i32 : i32 to vector<1x256xi32>
    %7 = arith.andi %3, %6 : vector<1x256xi32>
    %c-1_i32 = arith.constant -1 : i32
    %8 = vector.broadcast %c-1_i32 : i32 to vector<1x256xi32>
    %9 = arith.addi %5, %8 : vector<1x256xi32>
    %c0_i32 = arith.constant 0 : i32
    %10 = vector.broadcast %c0_i32 : i32 to vector<1x256xi32>
    %11 = arith.cmpi sge, %9, %10 : vector<1x256xi32>
    %c-1_i32_5 = arith.constant -1 : i32
    %12 = vector.broadcast %c-1_i32_5 : i32 to vector<1x256xi32>
    %13 = arith.addi %5, %12 : vector<1x256xi32>
    %c16_i32 = arith.constant 16 : i32
    %14 = vector.broadcast %c16_i32 : i32 to vector<1x256xi32>
    %15 = arith.cmpi slt, %13, %14 : vector<1x256xi32>
    %16 = arith.andi %11, %15 : vector<1x256xi1>
    %c-1_i32_6 = arith.constant -1 : i32
    %17 = vector.broadcast %c-1_i32_6 : i32 to vector<1x256xi32>
    %18 = arith.addi %7, %17 : vector<1x256xi32>
    %c0_i32_7 = arith.constant 0 : i32
    %19 = vector.broadcast %c0_i32_7 : i32 to vector<1x256xi32>
    %20 = arith.cmpi sge, %18, %19 : vector<1x256xi32>
    %21 = arith.andi %16, %20 : vector<1x256xi1>
    %c-1_i32_8 = arith.constant -1 : i32
    %22 = vector.broadcast %c-1_i32_8 : i32 to vector<1x256xi32>
    %23 = arith.addi %7, %22 : vector<1x256xi32>
    %c16_i32_9 = arith.constant 16 : i32
    %24 = vector.broadcast %c16_i32_9 : i32 to vector<1x256xi32>
    %25 = arith.cmpi slt, %23, %24 : vector<1x256xi32>
    %26 = arith.andi %21, %25 : vector<1x256xi1>
    %27 = arith.extui %26 : vector<1x256xi1> to vector<1x256xi32>
    %28 = arith.sitofp %27 : vector<1x256xi32> to vector<1x256xf32>
    %c-1_i32_10 = arith.constant -1 : i32
    %29 = vector.broadcast %c-1_i32_10 : i32 to vector<1x256xi32>
    %30 = arith.addi %5, %29 : vector<1x256xi32>
    %c0_i32_11 = arith.constant 0 : i32
    %31 = vector.broadcast %c0_i32_11 : i32 to vector<1x256xi32>
    %32 = arith.cmpi sge, %30, %31 : vector<1x256xi32>
    %c-1_i32_12 = arith.constant -1 : i32
    %33 = vector.broadcast %c-1_i32_12 : i32 to vector<1x256xi32>
    %34 = arith.addi %5, %33 : vector<1x256xi32>
    %c16_i32_13 = arith.constant 16 : i32
    %35 = vector.broadcast %c16_i32_13 : i32 to vector<1x256xi32>
    %36 = arith.cmpi slt, %34, %35 : vector<1x256xi32>
    %37 = arith.andi %32, %36 : vector<1x256xi1>
    %c0_i32_14 = arith.constant 0 : i32
    %38 = vector.broadcast %c0_i32_14 : i32 to vector<1x256xi32>
    %39 = arith.addi %7, %38 : vector<1x256xi32>
    %c0_i32_15 = arith.constant 0 : i32
    %40 = vector.broadcast %c0_i32_15 : i32 to vector<1x256xi32>
    %41 = arith.cmpi sge, %39, %40 : vector<1x256xi32>
    %42 = arith.andi %37, %41 : vector<1x256xi1>
    %c0_i32_16 = arith.constant 0 : i32
    %43 = vector.broadcast %c0_i32_16 : i32 to vector<1x256xi32>
    %44 = arith.addi %7, %43 : vector<1x256xi32>
    %c16_i32_17 = arith.constant 16 : i32
    %45 = vector.broadcast %c16_i32_17 : i32 to vector<1x256xi32>
    %46 = arith.cmpi slt, %44, %45 : vector<1x256xi32>
    %47 = arith.andi %42, %46 : vector<1x256xi1>
    %48 = arith.extui %47 : vector<1x256xi1> to vector<1x256xi32>
    %49 = arith.sitofp %48 : vector<1x256xi32> to vector<1x256xf32>
    %c-1_i32_18 = arith.constant -1 : i32
    %50 = vector.broadcast %c-1_i32_18 : i32 to vector<1x256xi32>
    %51 = arith.addi %5, %50 : vector<1x256xi32>
    %c0_i32_19 = arith.constant 0 : i32
    %52 = vector.broadcast %c0_i32_19 : i32 to vector<1x256xi32>
    %53 = arith.cmpi sge, %51, %52 : vector<1x256xi32>
    %c-1_i32_20 = arith.constant -1 : i32
    %54 = vector.broadcast %c-1_i32_20 : i32 to vector<1x256xi32>
    %55 = arith.addi %5, %54 : vector<1x256xi32>
    %c16_i32_21 = arith.constant 16 : i32
    %56 = vector.broadcast %c16_i32_21 : i32 to vector<1x256xi32>
    %57 = arith.cmpi slt, %55, %56 : vector<1x256xi32>
    %58 = arith.andi %53, %57 : vector<1x256xi1>
    %c1_i32 = arith.constant 1 : i32
    %59 = vector.broadcast %c1_i32 : i32 to vector<1x256xi32>
    %60 = arith.addi %7, %59 : vector<1x256xi32>
    %c0_i32_22 = arith.constant 0 : i32
    %61 = vector.broadcast %c0_i32_22 : i32 to vector<1x256xi32>
    %62 = arith.cmpi sge, %60, %61 : vector<1x256xi32>
    %63 = arith.andi %58, %62 : vector<1x256xi1>
    %c1_i32_23 = arith.constant 1 : i32
    %64 = vector.broadcast %c1_i32_23 : i32 to vector<1x256xi32>
    %65 = arith.addi %7, %64 : vector<1x256xi32>
    %c16_i32_24 = arith.constant 16 : i32
    %66 = vector.broadcast %c16_i32_24 : i32 to vector<1x256xi32>
    %67 = arith.cmpi slt, %65, %66 : vector<1x256xi32>
    %68 = arith.andi %63, %67 : vector<1x256xi1>
    %69 = arith.extui %68 : vector<1x256xi1> to vector<1x256xi32>
    %70 = arith.sitofp %69 : vector<1x256xi32> to vector<1x256xf32>
    %c0_i32_25 = arith.constant 0 : i32
    %71 = vector.broadcast %c0_i32_25 : i32 to vector<1x256xi32>
    %72 = arith.addi %5, %71 : vector<1x256xi32>
    %c0_i32_26 = arith.constant 0 : i32
    %73 = vector.broadcast %c0_i32_26 : i32 to vector<1x256xi32>
    %74 = arith.cmpi sge, %72, %73 : vector<1x256xi32>
    %c0_i32_27 = arith.constant 0 : i32
    %75 = vector.broadcast %c0_i32_27 : i32 to vector<1x256xi32>
    %76 = arith.addi %5, %75 : vector<1x256xi32>
    %c16_i32_28 = arith.constant 16 : i32
    %77 = vector.broadcast %c16_i32_28 : i32 to vector<1x256xi32>
    %78 = arith.cmpi slt, %76, %77 : vector<1x256xi32>
    %79 = arith.andi %74, %78 : vector<1x256xi1>
    %c-1_i32_29 = arith.constant -1 : i32
    %80 = vector.broadcast %c-1_i32_29 : i32 to vector<1x256xi32>
    %81 = arith.addi %7, %80 : vector<1x256xi32>
    %c0_i32_30 = arith.constant 0 : i32
    %82 = vector.broadcast %c0_i32_30 : i32 to vector<1x256xi32>
    %83 = arith.cmpi sge, %81, %82 : vector<1x256xi32>
    %84 = arith.andi %79, %83 : vector<1x256xi1>
    %c-1_i32_31 = arith.constant -1 : i32
    %85 = vector.broadcast %c-1_i32_31 : i32 to vector<1x256xi32>
    %86 = arith.addi %7, %85 : vector<1x256xi32>
    %c16_i32_32 = arith.constant 16 : i32
    %87 = vector.broadcast %c16_i32_32 : i32 to vector<1x256xi32>
    %88 = arith.cmpi slt, %86, %87 : vector<1x256xi32>
    %89 = arith.andi %84, %88 : vector<1x256xi1>
    %90 = arith.extui %89 : vector<1x256xi1> to vector<1x256xi32>
    %91 = arith.sitofp %90 : vector<1x256xi32> to vector<1x256xf32>
    %c0_i32_33 = arith.constant 0 : i32
    %92 = vector.broadcast %c0_i32_33 : i32 to vector<1x256xi32>
    %93 = arith.addi %5, %92 : vector<1x256xi32>
    %c0_i32_34 = arith.constant 0 : i32
    %94 = vector.broadcast %c0_i32_34 : i32 to vector<1x256xi32>
    %95 = arith.cmpi sge, %93, %94 : vector<1x256xi32>
    %c0_i32_35 = arith.constant 0 : i32
    %96 = vector.broadcast %c0_i32_35 : i32 to vector<1x256xi32>
    %97 = arith.addi %5, %96 : vector<1x256xi32>
    %c16_i32_36 = arith.constant 16 : i32
    %98 = vector.broadcast %c16_i32_36 : i32 to vector<1x256xi32>
    %99 = arith.cmpi slt, %97, %98 : vector<1x256xi32>
    %100 = arith.andi %95, %99 : vector<1x256xi1>
    %c1_i32_37 = arith.constant 1 : i32
    %101 = vector.broadcast %c1_i32_37 : i32 to vector<1x256xi32>
    %102 = arith.addi %7, %101 : vector<1x256xi32>
    %c0_i32_38 = arith.constant 0 : i32
    %103 = vector.broadcast %c0_i32_38 : i32 to vector<1x256xi32>
    %104 = arith.cmpi sge, %102, %103 : vector<1x256xi32>
    %105 = arith.andi %100, %104 : vector<1x256xi1>
    %c1_i32_39 = arith.constant 1 : i32
    %106 = vector.broadcast %c1_i32_39 : i32 to vector<1x256xi32>
    %107 = arith.addi %7, %106 : vector<1x256xi32>
    %c16_i32_40 = arith.constant 16 : i32
    %108 = vector.broadcast %c16_i32_40 : i32 to vector<1x256xi32>
    %109 = arith.cmpi slt, %107, %108 : vector<1x256xi32>
    %110 = arith.andi %105, %109 : vector<1x256xi1>
    %111 = arith.extui %110 : vector<1x256xi1> to vector<1x256xi32>
    %112 = arith.sitofp %111 : vector<1x256xi32> to vector<1x256xf32>
    %c1_i32_41 = arith.constant 1 : i32
    %113 = vector.broadcast %c1_i32_41 : i32 to vector<1x256xi32>
    %114 = arith.addi %5, %113 : vector<1x256xi32>
    %c0_i32_42 = arith.constant 0 : i32
    %115 = vector.broadcast %c0_i32_42 : i32 to vector<1x256xi32>
    %116 = arith.cmpi sge, %114, %115 : vector<1x256xi32>
    %c1_i32_43 = arith.constant 1 : i32
    %117 = vector.broadcast %c1_i32_43 : i32 to vector<1x256xi32>
    %118 = arith.addi %5, %117 : vector<1x256xi32>
    %c16_i32_44 = arith.constant 16 : i32
    %119 = vector.broadcast %c16_i32_44 : i32 to vector<1x256xi32>
    %120 = arith.cmpi slt, %118, %119 : vector<1x256xi32>
    %121 = arith.andi %116, %120 : vector<1x256xi1>
    %c-1_i32_45 = arith.constant -1 : i32
    %122 = vector.broadcast %c-1_i32_45 : i32 to vector<1x256xi32>
    %123 = arith.addi %7, %122 : vector<1x256xi32>
    %c0_i32_46 = arith.constant 0 : i32
    %124 = vector.broadcast %c0_i32_46 : i32 to vector<1x256xi32>
    %125 = arith.cmpi sge, %123, %124 : vector<1x256xi32>
    %126 = arith.andi %121, %125 : vector<1x256xi1>
    %c-1_i32_47 = arith.constant -1 : i32
    %127 = vector.broadcast %c-1_i32_47 : i32 to vector<1x256xi32>
    %128 = arith.addi %7, %127 : vector<1x256xi32>
    %c16_i32_48 = arith.constant 16 : i32
    %129 = vector.broadcast %c16_i32_48 : i32 to vector<1x256xi32>
    %130 = arith.cmpi slt, %128, %129 : vector<1x256xi32>
    %131 = arith.andi %126, %130 : vector<1x256xi1>
    %132 = arith.extui %131 : vector<1x256xi1> to vector<1x256xi32>
    %133 = arith.sitofp %132 : vector<1x256xi32> to vector<1x256xf32>
    %c1_i32_49 = arith.constant 1 : i32
    %134 = vector.broadcast %c1_i32_49 : i32 to vector<1x256xi32>
    %135 = arith.addi %5, %134 : vector<1x256xi32>
    %c0_i32_50 = arith.constant 0 : i32
    %136 = vector.broadcast %c0_i32_50 : i32 to vector<1x256xi32>
    %137 = arith.cmpi sge, %135, %136 : vector<1x256xi32>
    %c1_i32_51 = arith.constant 1 : i32
    %138 = vector.broadcast %c1_i32_51 : i32 to vector<1x256xi32>
    %139 = arith.addi %5, %138 : vector<1x256xi32>
    %c16_i32_52 = arith.constant 16 : i32
    %140 = vector.broadcast %c16_i32_52 : i32 to vector<1x256xi32>
    %141 = arith.cmpi slt, %139, %140 : vector<1x256xi32>
    %142 = arith.andi %137, %141 : vector<1x256xi1>
    %c0_i32_53 = arith.constant 0 : i32
    %143 = vector.broadcast %c0_i32_53 : i32 to vector<1x256xi32>
    %144 = arith.addi %7, %143 : vector<1x256xi32>
    %c0_i32_54 = arith.constant 0 : i32
    %145 = vector.broadcast %c0_i32_54 : i32 to vector<1x256xi32>
    %146 = arith.cmpi sge, %144, %145 : vector<1x256xi32>
    %147 = arith.andi %142, %146 : vector<1x256xi1>
    %c0_i32_55 = arith.constant 0 : i32
    %148 = vector.broadcast %c0_i32_55 : i32 to vector<1x256xi32>
    %149 = arith.addi %7, %148 : vector<1x256xi32>
    %c16_i32_56 = arith.constant 16 : i32
    %150 = vector.broadcast %c16_i32_56 : i32 to vector<1x256xi32>
    %151 = arith.cmpi slt, %149, %150 : vector<1x256xi32>
    %152 = arith.andi %147, %151 : vector<1x256xi1>
    %153 = arith.extui %152 : vector<1x256xi1> to vector<1x256xi32>
    %154 = arith.sitofp %153 : vector<1x256xi32> to vector<1x256xf32>
    %c1_i32_57 = arith.constant 1 : i32
    %155 = vector.broadcast %c1_i32_57 : i32 to vector<1x256xi32>
    %156 = arith.addi %5, %155 : vector<1x256xi32>
    %c0_i32_58 = arith.constant 0 : i32
    %157 = vector.broadcast %c0_i32_58 : i32 to vector<1x256xi32>
    %158 = arith.cmpi sge, %156, %157 : vector<1x256xi32>
    %c1_i32_59 = arith.constant 1 : i32
    %159 = vector.broadcast %c1_i32_59 : i32 to vector<1x256xi32>
    %160 = arith.addi %5, %159 : vector<1x256xi32>
    %c16_i32_60 = arith.constant 16 : i32
    %161 = vector.broadcast %c16_i32_60 : i32 to vector<1x256xi32>
    %162 = arith.cmpi slt, %160, %161 : vector<1x256xi32>
    %163 = arith.andi %158, %162 : vector<1x256xi1>
    %c1_i32_61 = arith.constant 1 : i32
    %164 = vector.broadcast %c1_i32_61 : i32 to vector<1x256xi32>
    %165 = arith.addi %7, %164 : vector<1x256xi32>
    %c0_i32_62 = arith.constant 0 : i32
    %166 = vector.broadcast %c0_i32_62 : i32 to vector<1x256xi32>
    %167 = arith.cmpi sge, %165, %166 : vector<1x256xi32>
    %168 = arith.andi %163, %167 : vector<1x256xi1>
    %c1_i32_63 = arith.constant 1 : i32
    %169 = vector.broadcast %c1_i32_63 : i32 to vector<1x256xi32>
    %170 = arith.addi %7, %169 : vector<1x256xi32>
    %c16_i32_64 = arith.constant 16 : i32
    %171 = vector.broadcast %c16_i32_64 : i32 to vector<1x256xi32>
    %172 = arith.cmpi slt, %170, %171 : vector<1x256xi32>
    %173 = arith.andi %168, %172 : vector<1x256xi1>
    %174 = arith.extui %173 : vector<1x256xi1> to vector<1x256xi32>
    %175 = arith.sitofp %174 : vector<1x256xi32> to vector<1x256xf32>
    %c0_65 = arith.constant 0 : index
    %176 = memref.load %arg6[%c0_65] : memref<3xf32, #tpu.memory_space<smem>>
    %c1 = arith.constant 1 : index
    %177 = memref.load %arg6[%c1] : memref<3xf32, #tpu.memory_space<smem>>
    %c2 = arith.constant 2 : index
    %178 = memref.load %arg6[%c2] : memref<3xf32, #tpu.memory_space<smem>>
    %cst = arith.constant 0.000000e+00 : f32
    %179 = vector.broadcast %cst : f32 to vector<2x256xf32>
    %cst_66 = arith.constant 0.000000e+00 : f32
    %180 = vector.broadcast %cst_66 : f32 to vector<2x256xf32>
    %181 = vector.extract_strided_slice %0 {offsets = [0, 0, 0], sizes = [2, 1, 256], strides = [1, 1, 1]} : vector<2x4x256xf32> to vector<2x1x256xf32>
    %182 = vector.shape_cast %181 : vector<2x1x256xf32> to vector<2x256xf32>
    %c17_i32 = arith.constant 17 : i32
    %183 = tpu.dynamic_rotate %182 by %c17_i32 dim 1 : vector<2x256xf32>, i32 -> vector<2x256xf32>
    %184 = vector.broadcast %28 : vector<1x256xf32> to vector<2x256xf32>
    %185 = arith.mulf %183, %184 : vector<2x256xf32>
    %c0_67 = arith.constant 0 : index
    %186 = memref.load %arg3[%c0_67] : memref<45xf32, #tpu.memory_space<smem>>
    %cst_68 = arith.constant 0.000000e+00 : f32
    %187 = vector.broadcast %cst_68 : f32 to vector<2x256xf32>
    %188 = arith.maximumf %185, %187 : vector<2x256xf32>
    %189 = vector.broadcast %186 : f32 to vector<2x256xf32>
    %190 = arith.mulf %189, %188 : vector<2x256xf32>
    %191 = arith.addf %179, %190 : vector<2x256xf32>
    %c0_69 = arith.constant 0 : index
    %192 = memref.load %arg4[%c0_69] : memref<45xf32, #tpu.memory_space<smem>>
    %193 = vector.broadcast %192 : f32 to vector<2x256xf32>
    %194 = arith.mulf %193, %185 : vector<2x256xf32>
    %195 = arith.addf %180, %194 : vector<2x256xf32>
    %c16_i32_70 = arith.constant 16 : i32
    %196 = tpu.dynamic_rotate %182 by %c16_i32_70 dim 1 : vector<2x256xf32>, i32 -> vector<2x256xf32>
    %197 = vector.broadcast %49 : vector<1x256xf32> to vector<2x256xf32>
    %198 = arith.mulf %196, %197 : vector<2x256xf32>
    %c1_71 = arith.constant 1 : index
    %199 = memref.load %arg3[%c1_71] : memref<45xf32, #tpu.memory_space<smem>>
    %cst_72 = arith.constant 0.000000e+00 : f32
    %200 = vector.broadcast %cst_72 : f32 to vector<2x256xf32>
    %201 = arith.maximumf %198, %200 : vector<2x256xf32>
    %202 = vector.broadcast %199 : f32 to vector<2x256xf32>
    %203 = arith.mulf %202, %201 : vector<2x256xf32>
    %204 = arith.addf %191, %203 : vector<2x256xf32>
    %c1_73 = arith.constant 1 : index
    %205 = memref.load %arg4[%c1_73] : memref<45xf32, #tpu.memory_space<smem>>
    %206 = vector.broadcast %205 : f32 to vector<2x256xf32>
    %207 = arith.mulf %206, %198 : vector<2x256xf32>
    %208 = arith.addf %195, %207 : vector<2x256xf32>
    %c15_i32_74 = arith.constant 15 : i32
    %209 = tpu.dynamic_rotate %182 by %c15_i32_74 dim 1 : vector<2x256xf32>, i32 -> vector<2x256xf32>
    %210 = vector.broadcast %70 : vector<1x256xf32> to vector<2x256xf32>
    %211 = arith.mulf %209, %210 : vector<2x256xf32>
    %c2_75 = arith.constant 2 : index
    %212 = memref.load %arg3[%c2_75] : memref<45xf32, #tpu.memory_space<smem>>
    %cst_76 = arith.constant 0.000000e+00 : f32
    %213 = vector.broadcast %cst_76 : f32 to vector<2x256xf32>
    %214 = arith.maximumf %211, %213 : vector<2x256xf32>
    %215 = vector.broadcast %212 : f32 to vector<2x256xf32>
    %216 = arith.mulf %215, %214 : vector<2x256xf32>
    %217 = arith.addf %204, %216 : vector<2x256xf32>
    %c2_77 = arith.constant 2 : index
    %218 = memref.load %arg4[%c2_77] : memref<45xf32, #tpu.memory_space<smem>>
    %219 = vector.broadcast %218 : f32 to vector<2x256xf32>
    %220 = arith.mulf %219, %211 : vector<2x256xf32>
    %221 = arith.addf %208, %220 : vector<2x256xf32>
    %c1_i32_78 = arith.constant 1 : i32
    %222 = tpu.dynamic_rotate %182 by %c1_i32_78 dim 1 : vector<2x256xf32>, i32 -> vector<2x256xf32>
    %223 = vector.broadcast %91 : vector<1x256xf32> to vector<2x256xf32>
    %224 = arith.mulf %222, %223 : vector<2x256xf32>
    %c3 = arith.constant 3 : index
    %225 = memref.load %arg3[%c3] : memref<45xf32, #tpu.memory_space<smem>>
    %cst_79 = arith.constant 0.000000e+00 : f32
    %226 = vector.broadcast %cst_79 : f32 to vector<2x256xf32>
    %227 = arith.maximumf %224, %226 : vector<2x256xf32>
    %228 = vector.broadcast %225 : f32 to vector<2x256xf32>
    %229 = arith.mulf %228, %227 : vector<2x256xf32>
    %230 = arith.addf %217, %229 : vector<2x256xf32>
    %c3_80 = arith.constant 3 : index
    %231 = memref.load %arg4[%c3_80] : memref<45xf32, #tpu.memory_space<smem>>
    %232 = vector.broadcast %231 : f32 to vector<2x256xf32>
    %233 = arith.mulf %232, %224 : vector<2x256xf32>
    %234 = arith.addf %221, %233 : vector<2x256xf32>
    %c4 = arith.constant 4 : index
    %235 = memref.load %arg3[%c4] : memref<45xf32, #tpu.memory_space<smem>>
    %cst_81 = arith.constant 0.000000e+00 : f32
    %236 = vector.broadcast %cst_81 : f32 to vector<2x256xf32>
    %237 = arith.maximumf %182, %236 : vector<2x256xf32>
    %238 = vector.broadcast %235 : f32 to vector<2x256xf32>
    %239 = arith.mulf %238, %237 : vector<2x256xf32>
    %240 = arith.addf %230, %239 : vector<2x256xf32>
    %c4_82 = arith.constant 4 : index
    %241 = memref.load %arg4[%c4_82] : memref<45xf32, #tpu.memory_space<smem>>
    %242 = vector.broadcast %241 : f32 to vector<2x256xf32>
    %243 = arith.mulf %242, %182 : vector<2x256xf32>
    %244 = arith.addf %234, %243 : vector<2x256xf32>
    %c255_i32 = arith.constant 255 : i32
    %245 = tpu.dynamic_rotate %182 by %c255_i32 dim 1 : vector<2x256xf32>, i32 -> vector<2x256xf32>
    %246 = vector.broadcast %112 : vector<1x256xf32> to vector<2x256xf32>
    %247 = arith.mulf %245, %246 : vector<2x256xf32>
    %c5 = arith.constant 5 : index
    %248 = memref.load %arg3[%c5] : memref<45xf32, #tpu.memory_space<smem>>
    %cst_83 = arith.constant 0.000000e+00 : f32
    %249 = vector.broadcast %cst_83 : f32 to vector<2x256xf32>
    %250 = arith.maximumf %247, %249 : vector<2x256xf32>
    %251 = vector.broadcast %248 : f32 to vector<2x256xf32>
    %252 = arith.mulf %251, %250 : vector<2x256xf32>
    %253 = arith.addf %240, %252 : vector<2x256xf32>
    %c5_84 = arith.constant 5 : index
    %254 = memref.load %arg4[%c5_84] : memref<45xf32, #tpu.memory_space<smem>>
    %255 = vector.broadcast %254 : f32 to vector<2x256xf32>
    %256 = arith.mulf %255, %247 : vector<2x256xf32>
    %257 = arith.addf %244, %256 : vector<2x256xf32>
    %c241_i32 = arith.constant 241 : i32
    %258 = tpu.dynamic_rotate %182 by %c241_i32 dim 1 : vector<2x256xf32>, i32 -> vector<2x256xf32>
    %259 = vector.broadcast %133 : vector<1x256xf32> to vector<2x256xf32>
    %260 = arith.mulf %258, %259 : vector<2x256xf32>
    %c6 = arith.constant 6 : index
    %261 = memref.load %arg3[%c6] : memref<45xf32, #tpu.memory_space<smem>>
    %cst_85 = arith.constant 0.000000e+00 : f32
    %262 = vector.broadcast %cst_85 : f32 to vector<2x256xf32>
    %263 = arith.maximumf %260, %262 : vector<2x256xf32>
    %264 = vector.broadcast %261 : f32 to vector<2x256xf32>
    %265 = arith.mulf %264, %263 : vector<2x256xf32>
    %266 = arith.addf %253, %265 : vector<2x256xf32>
    %c6_86 = arith.constant 6 : index
    %267 = memref.load %arg4[%c6_86] : memref<45xf32, #tpu.memory_space<smem>>
    %268 = vector.broadcast %267 : f32 to vector<2x256xf32>
    %269 = arith.mulf %268, %260 : vector<2x256xf32>
    %270 = arith.addf %257, %269 : vector<2x256xf32>
    %c240_i32 = arith.constant 240 : i32
    %271 = tpu.dynamic_rotate %182 by %c240_i32 dim 1 : vector<2x256xf32>, i32 -> vector<2x256xf32>
    %272 = vector.broadcast %154 : vector<1x256xf32> to vector<2x256xf32>
    %273 = arith.mulf %271, %272 : vector<2x256xf32>
    %c7 = arith.constant 7 : index
    %274 = memref.load %arg3[%c7] : memref<45xf32, #tpu.memory_space<smem>>
    %cst_87 = arith.constant 0.000000e+00 : f32
    %275 = vector.broadcast %cst_87 : f32 to vector<2x256xf32>
    %276 = arith.maximumf %273, %275 : vector<2x256xf32>
    %277 = vector.broadcast %274 : f32 to vector<2x256xf32>
    %278 = arith.mulf %277, %276 : vector<2x256xf32>
    %279 = arith.addf %266, %278 : vector<2x256xf32>
    %c7_88 = arith.constant 7 : index
    %280 = memref.load %arg4[%c7_88] : memref<45xf32, #tpu.memory_space<smem>>
    %281 = vector.broadcast %280 : f32 to vector<2x256xf32>
    %282 = arith.mulf %281, %273 : vector<2x256xf32>
    %283 = arith.addf %270, %282 : vector<2x256xf32>
    %c239_i32 = arith.constant 239 : i32
    %284 = tpu.dynamic_rotate %182 by %c239_i32 dim 1 : vector<2x256xf32>, i32 -> vector<2x256xf32>
    %285 = vector.broadcast %175 : vector<1x256xf32> to vector<2x256xf32>
    %286 = arith.mulf %284, %285 : vector<2x256xf32>
    %c8 = arith.constant 8 : index
    %287 = memref.load %arg3[%c8] : memref<45xf32, #tpu.memory_space<smem>>
    %cst_89 = arith.constant 0.000000e+00 : f32
    %288 = vector.broadcast %cst_89 : f32 to vector<2x256xf32>
    %289 = arith.maximumf %286, %288 : vector<2x256xf32>
    %290 = vector.broadcast %287 : f32 to vector<2x256xf32>
    %291 = arith.mulf %290, %289 : vector<2x256xf32>
    %292 = arith.addf %279, %291 : vector<2x256xf32>
    %c8_90 = arith.constant 8 : index
    %293 = memref.load %arg4[%c8_90] : memref<45xf32, #tpu.memory_space<smem>>
    %294 = vector.broadcast %293 : f32 to vector<2x256xf32>
    %295 = arith.mulf %294, %286 : vector<2x256xf32>
    %296 = arith.addf %283, %295 : vector<2x256xf32>
    %297 = vector.extract_strided_slice %0 {offsets = [0, 1, 0], sizes = [2, 1, 256], strides = [1, 1, 1]} : vector<2x4x256xf32> to vector<2x1x256xf32>
    %298 = vector.shape_cast %297 : vector<2x1x256xf32> to vector<2x256xf32>
    %c17_i32_91 = arith.constant 17 : i32
    %299 = tpu.dynamic_rotate %298 by %c17_i32_91 dim 1 : vector<2x256xf32>, i32 -> vector<2x256xf32>
    %300 = vector.broadcast %28 : vector<1x256xf32> to vector<2x256xf32>
    %301 = arith.mulf %299, %300 : vector<2x256xf32>
    %c9 = arith.constant 9 : index
    %302 = memref.load %arg3[%c9] : memref<45xf32, #tpu.memory_space<smem>>
    %cst_92 = arith.constant 0.000000e+00 : f32
    %303 = vector.broadcast %cst_92 : f32 to vector<2x256xf32>
    %304 = arith.maximumf %301, %303 : vector<2x256xf32>
    %305 = vector.broadcast %302 : f32 to vector<2x256xf32>
    %306 = arith.mulf %305, %304 : vector<2x256xf32>
    %307 = arith.addf %292, %306 : vector<2x256xf32>
    %c9_93 = arith.constant 9 : index
    %308 = memref.load %arg4[%c9_93] : memref<45xf32, #tpu.memory_space<smem>>
    %309 = vector.broadcast %308 : f32 to vector<2x256xf32>
    %310 = arith.mulf %309, %301 : vector<2x256xf32>
    %311 = arith.addf %296, %310 : vector<2x256xf32>
    %c16_i32_94 = arith.constant 16 : i32
    %312 = tpu.dynamic_rotate %298 by %c16_i32_94 dim 1 : vector<2x256xf32>, i32 -> vector<2x256xf32>
    %313 = vector.broadcast %49 : vector<1x256xf32> to vector<2x256xf32>
    %314 = arith.mulf %312, %313 : vector<2x256xf32>
    %c10 = arith.constant 10 : index
    %315 = memref.load %arg3[%c10] : memref<45xf32, #tpu.memory_space<smem>>
    %cst_95 = arith.constant 0.000000e+00 : f32
    %316 = vector.broadcast %cst_95 : f32 to vector<2x256xf32>
    %317 = arith.maximumf %314, %316 : vector<2x256xf32>
    %318 = vector.broadcast %315 : f32 to vector<2x256xf32>
    %319 = arith.mulf %318, %317 : vector<2x256xf32>
    %320 = arith.addf %307, %319 : vector<2x256xf32>
    %c10_96 = arith.constant 10 : index
    %321 = memref.load %arg4[%c10_96] : memref<45xf32, #tpu.memory_space<smem>>
    %322 = vector.broadcast %321 : f32 to vector<2x256xf32>
    %323 = arith.mulf %322, %314 : vector<2x256xf32>
    %324 = arith.addf %311, %323 : vector<2x256xf32>
    %c15_i32_97 = arith.constant 15 : i32
    %325 = tpu.dynamic_rotate %298 by %c15_i32_97 dim 1 : vector<2x256xf32>, i32 -> vector<2x256xf32>
    %326 = vector.broadcast %70 : vector<1x256xf32> to vector<2x256xf32>
    %327 = arith.mulf %325, %326 : vector<2x256xf32>
    %c11 = arith.constant 11 : index
    %328 = memref.load %arg3[%c11] : memref<45xf32, #tpu.memory_space<smem>>
    %cst_98 = arith.constant 0.000000e+00 : f32
    %329 = vector.broadcast %cst_98 : f32 to vector<2x256xf32>
    %330 = arith.maximumf %327, %329 : vector<2x256xf32>
    %331 = vector.broadcast %328 : f32 to vector<2x256xf32>
    %332 = arith.mulf %331, %330 : vector<2x256xf32>
    %333 = arith.addf %320, %332 : vector<2x256xf32>
    %c11_99 = arith.constant 11 : index
    %334 = memref.load %arg4[%c11_99] : memref<45xf32, #tpu.memory_space<smem>>
    %335 = vector.broadcast %334 : f32 to vector<2x256xf32>
    %336 = arith.mulf %335, %327 : vector<2x256xf32>
    %337 = arith.addf %324, %336 : vector<2x256xf32>
    %c1_i32_100 = arith.constant 1 : i32
    %338 = tpu.dynamic_rotate %298 by %c1_i32_100 dim 1 : vector<2x256xf32>, i32 -> vector<2x256xf32>
    %339 = vector.broadcast %91 : vector<1x256xf32> to vector<2x256xf32>
    %340 = arith.mulf %338, %339 : vector<2x256xf32>
    %c12 = arith.constant 12 : index
    %341 = memref.load %arg3[%c12] : memref<45xf32, #tpu.memory_space<smem>>
    %cst_101 = arith.constant 0.000000e+00 : f32
    %342 = vector.broadcast %cst_101 : f32 to vector<2x256xf32>
    %343 = arith.maximumf %340, %342 : vector<2x256xf32>
    %344 = vector.broadcast %341 : f32 to vector<2x256xf32>
    %345 = arith.mulf %344, %343 : vector<2x256xf32>
    %346 = arith.addf %333, %345 : vector<2x256xf32>
    %c12_102 = arith.constant 12 : index
    %347 = memref.load %arg4[%c12_102] : memref<45xf32, #tpu.memory_space<smem>>
    %348 = vector.broadcast %347 : f32 to vector<2x256xf32>
    %349 = arith.mulf %348, %340 : vector<2x256xf32>
    %350 = arith.addf %337, %349 : vector<2x256xf32>
    %c13 = arith.constant 13 : index
    %351 = memref.load %arg3[%c13] : memref<45xf32, #tpu.memory_space<smem>>
    %cst_103 = arith.constant 0.000000e+00 : f32
    %352 = vector.broadcast %cst_103 : f32 to vector<2x256xf32>
    %353 = arith.maximumf %298, %352 : vector<2x256xf32>
    %354 = vector.broadcast %351 : f32 to vector<2x256xf32>
    %355 = arith.mulf %354, %353 : vector<2x256xf32>
    %356 = arith.addf %346, %355 : vector<2x256xf32>
    %c13_104 = arith.constant 13 : index
    %357 = memref.load %arg4[%c13_104] : memref<45xf32, #tpu.memory_space<smem>>
    %358 = vector.broadcast %357 : f32 to vector<2x256xf32>
    %359 = arith.mulf %358, %298 : vector<2x256xf32>
    %360 = arith.addf %350, %359 : vector<2x256xf32>
    %c255_i32_105 = arith.constant 255 : i32
    %361 = tpu.dynamic_rotate %298 by %c255_i32_105 dim 1 : vector<2x256xf32>, i32 -> vector<2x256xf32>
    %362 = vector.broadcast %112 : vector<1x256xf32> to vector<2x256xf32>
    %363 = arith.mulf %361, %362 : vector<2x256xf32>
    %c14 = arith.constant 14 : index
    %364 = memref.load %arg3[%c14] : memref<45xf32, #tpu.memory_space<smem>>
    %cst_106 = arith.constant 0.000000e+00 : f32
    %365 = vector.broadcast %cst_106 : f32 to vector<2x256xf32>
    %366 = arith.maximumf %363, %365 : vector<2x256xf32>
    %367 = vector.broadcast %364 : f32 to vector<2x256xf32>
    %368 = arith.mulf %367, %366 : vector<2x256xf32>
    %369 = arith.addf %356, %368 : vector<2x256xf32>
    %c14_107 = arith.constant 14 : index
    %370 = memref.load %arg4[%c14_107] : memref<45xf32, #tpu.memory_space<smem>>
    %371 = vector.broadcast %370 : f32 to vector<2x256xf32>
    %372 = arith.mulf %371, %363 : vector<2x256xf32>
    %373 = arith.addf %360, %372 : vector<2x256xf32>
    %c241_i32_108 = arith.constant 241 : i32
    %374 = tpu.dynamic_rotate %298 by %c241_i32_108 dim 1 : vector<2x256xf32>, i32 -> vector<2x256xf32>
    %375 = vector.broadcast %133 : vector<1x256xf32> to vector<2x256xf32>
    %376 = arith.mulf %374, %375 : vector<2x256xf32>
    %c15 = arith.constant 15 : index
    %377 = memref.load %arg3[%c15] : memref<45xf32, #tpu.memory_space<smem>>
    %cst_109 = arith.constant 0.000000e+00 : f32
    %378 = vector.broadcast %cst_109 : f32 to vector<2x256xf32>
    %379 = arith.maximumf %376, %378 : vector<2x256xf32>
    %380 = vector.broadcast %377 : f32 to vector<2x256xf32>
    %381 = arith.mulf %380, %379 : vector<2x256xf32>
    %382 = arith.addf %369, %381 : vector<2x256xf32>
    %c15_110 = arith.constant 15 : index
    %383 = memref.load %arg4[%c15_110] : memref<45xf32, #tpu.memory_space<smem>>
    %384 = vector.broadcast %383 : f32 to vector<2x256xf32>
    %385 = arith.mulf %384, %376 : vector<2x256xf32>
    %386 = arith.addf %373, %385 : vector<2x256xf32>
    %c240_i32_111 = arith.constant 240 : i32
    %387 = tpu.dynamic_rotate %298 by %c240_i32_111 dim 1 : vector<2x256xf32>, i32 -> vector<2x256xf32>
    %388 = vector.broadcast %154 : vector<1x256xf32> to vector<2x256xf32>
    %389 = arith.mulf %387, %388 : vector<2x256xf32>
    %c16 = arith.constant 16 : index
    %390 = memref.load %arg3[%c16] : memref<45xf32, #tpu.memory_space<smem>>
    %cst_112 = arith.constant 0.000000e+00 : f32
    %391 = vector.broadcast %cst_112 : f32 to vector<2x256xf32>
    %392 = arith.maximumf %389, %391 : vector<2x256xf32>
    %393 = vector.broadcast %390 : f32 to vector<2x256xf32>
    %394 = arith.mulf %393, %392 : vector<2x256xf32>
    %395 = arith.addf %382, %394 : vector<2x256xf32>
    %c16_113 = arith.constant 16 : index
    %396 = memref.load %arg4[%c16_113] : memref<45xf32, #tpu.memory_space<smem>>
    %397 = vector.broadcast %396 : f32 to vector<2x256xf32>
    %398 = arith.mulf %397, %389 : vector<2x256xf32>
    %399 = arith.addf %386, %398 : vector<2x256xf32>
    %c239_i32_114 = arith.constant 239 : i32
    %400 = tpu.dynamic_rotate %298 by %c239_i32_114 dim 1 : vector<2x256xf32>, i32 -> vector<2x256xf32>
    %401 = vector.broadcast %175 : vector<1x256xf32> to vector<2x256xf32>
    %402 = arith.mulf %400, %401 : vector<2x256xf32>
    %c17 = arith.constant 17 : index
    %403 = memref.load %arg3[%c17] : memref<45xf32, #tpu.memory_space<smem>>
    %cst_115 = arith.constant 0.000000e+00 : f32
    %404 = vector.broadcast %cst_115 : f32 to vector<2x256xf32>
    %405 = arith.maximumf %402, %404 : vector<2x256xf32>
    %406 = vector.broadcast %403 : f32 to vector<2x256xf32>
    %407 = arith.mulf %406, %405 : vector<2x256xf32>
    %408 = arith.addf %395, %407 : vector<2x256xf32>
    %c17_116 = arith.constant 17 : index
    %409 = memref.load %arg4[%c17_116] : memref<45xf32, #tpu.memory_space<smem>>
    %410 = vector.broadcast %409 : f32 to vector<2x256xf32>
    %411 = arith.mulf %410, %402 : vector<2x256xf32>
    %412 = arith.addf %399, %411 : vector<2x256xf32>
    %413 = vector.extract_strided_slice %0 {offsets = [0, 2, 0], sizes = [2, 1, 256], strides = [1, 1, 1]} : vector<2x4x256xf32> to vector<2x1x256xf32>
    %414 = vector.shape_cast %413 : vector<2x1x256xf32> to vector<2x256xf32>
    %c17_i32_117 = arith.constant 17 : i32
    %415 = tpu.dynamic_rotate %414 by %c17_i32_117 dim 1 : vector<2x256xf32>, i32 -> vector<2x256xf32>
    %416 = vector.broadcast %28 : vector<1x256xf32> to vector<2x256xf32>
    %417 = arith.mulf %415, %416 : vector<2x256xf32>
    %c18 = arith.constant 18 : index
    %418 = memref.load %arg3[%c18] : memref<45xf32, #tpu.memory_space<smem>>
    %cst_118 = arith.constant 0.000000e+00 : f32
    %419 = vector.broadcast %cst_118 : f32 to vector<2x256xf32>
    %420 = arith.maximumf %417, %419 : vector<2x256xf32>
    %421 = vector.broadcast %418 : f32 to vector<2x256xf32>
    %422 = arith.mulf %421, %420 : vector<2x256xf32>
    %423 = arith.addf %408, %422 : vector<2x256xf32>
    %c18_119 = arith.constant 18 : index
    %424 = memref.load %arg4[%c18_119] : memref<45xf32, #tpu.memory_space<smem>>
    %425 = vector.broadcast %424 : f32 to vector<2x256xf32>
    %426 = arith.mulf %425, %417 : vector<2x256xf32>
    %427 = arith.addf %412, %426 : vector<2x256xf32>
    %c16_i32_120 = arith.constant 16 : i32
    %428 = tpu.dynamic_rotate %414 by %c16_i32_120 dim 1 : vector<2x256xf32>, i32 -> vector<2x256xf32>
    %429 = vector.broadcast %49 : vector<1x256xf32> to vector<2x256xf32>
    %430 = arith.mulf %428, %429 : vector<2x256xf32>
    %c19 = arith.constant 19 : index
    %431 = memref.load %arg3[%c19] : memref<45xf32, #tpu.memory_space<smem>>
    %cst_121 = arith.constant 0.000000e+00 : f32
    %432 = vector.broadcast %cst_121 : f32 to vector<2x256xf32>
    %433 = arith.maximumf %430, %432 : vector<2x256xf32>
    %434 = vector.broadcast %431 : f32 to vector<2x256xf32>
    %435 = arith.mulf %434, %433 : vector<2x256xf32>
    %436 = arith.addf %423, %435 : vector<2x256xf32>
    %c19_122 = arith.constant 19 : index
    %437 = memref.load %arg4[%c19_122] : memref<45xf32, #tpu.memory_space<smem>>
    %438 = vector.broadcast %437 : f32 to vector<2x256xf32>
    %439 = arith.mulf %438, %430 : vector<2x256xf32>
    %440 = arith.addf %427, %439 : vector<2x256xf32>
    %c15_i32_123 = arith.constant 15 : i32
    %441 = tpu.dynamic_rotate %414 by %c15_i32_123 dim 1 : vector<2x256xf32>, i32 -> vector<2x256xf32>
    %442 = vector.broadcast %70 : vector<1x256xf32> to vector<2x256xf32>
    %443 = arith.mulf %441, %442 : vector<2x256xf32>
    %c20 = arith.constant 20 : index
    %444 = memref.load %arg3[%c20] : memref<45xf32, #tpu.memory_space<smem>>
    %cst_124 = arith.constant 0.000000e+00 : f32
    %445 = vector.broadcast %cst_124 : f32 to vector<2x256xf32>
    %446 = arith.maximumf %443, %445 : vector<2x256xf32>
    %447 = vector.broadcast %444 : f32 to vector<2x256xf32>
    %448 = arith.mulf %447, %446 : vector<2x256xf32>
    %449 = arith.addf %436, %448 : vector<2x256xf32>
    %c20_125 = arith.constant 20 : index
    %450 = memref.load %arg4[%c20_125] : memref<45xf32, #tpu.memory_space<smem>>
    %451 = vector.broadcast %450 : f32 to vector<2x256xf32>
    %452 = arith.mulf %451, %443 : vector<2x256xf32>
    %453 = arith.addf %440, %452 : vector<2x256xf32>
    %c1_i32_126 = arith.constant 1 : i32
    %454 = tpu.dynamic_rotate %414 by %c1_i32_126 dim 1 : vector<2x256xf32>, i32 -> vector<2x256xf32>
    %455 = vector.broadcast %91 : vector<1x256xf32> to vector<2x256xf32>
    %456 = arith.mulf %454, %455 : vector<2x256xf32>
    %c21 = arith.constant 21 : index
    %457 = memref.load %arg3[%c21] : memref<45xf32, #tpu.memory_space<smem>>
    %cst_127 = arith.constant 0.000000e+00 : f32
    %458 = vector.broadcast %cst_127 : f32 to vector<2x256xf32>
    %459 = arith.maximumf %456, %458 : vector<2x256xf32>
    %460 = vector.broadcast %457 : f32 to vector<2x256xf32>
    %461 = arith.mulf %460, %459 : vector<2x256xf32>
    %462 = arith.addf %449, %461 : vector<2x256xf32>
    %c21_128 = arith.constant 21 : index
    %463 = memref.load %arg4[%c21_128] : memref<45xf32, #tpu.memory_space<smem>>
    %464 = vector.broadcast %463 : f32 to vector<2x256xf32>
    %465 = arith.mulf %464, %456 : vector<2x256xf32>
    %466 = arith.addf %453, %465 : vector<2x256xf32>
    %c22 = arith.constant 22 : index
    %467 = memref.load %arg3[%c22] : memref<45xf32, #tpu.memory_space<smem>>
    %cst_129 = arith.constant 0.000000e+00 : f32
    %468 = vector.broadcast %cst_129 : f32 to vector<2x256xf32>
    %469 = arith.maximumf %414, %468 : vector<2x256xf32>
    %470 = vector.broadcast %467 : f32 to vector<2x256xf32>
    %471 = arith.mulf %470, %469 : vector<2x256xf32>
    %472 = arith.addf %462, %471 : vector<2x256xf32>
    %c22_130 = arith.constant 22 : index
    %473 = memref.load %arg4[%c22_130] : memref<45xf32, #tpu.memory_space<smem>>
    %474 = vector.broadcast %473 : f32 to vector<2x256xf32>
    %475 = arith.mulf %474, %414 : vector<2x256xf32>
    %476 = arith.addf %466, %475 : vector<2x256xf32>
    %c255_i32_131 = arith.constant 255 : i32
    %477 = tpu.dynamic_rotate %414 by %c255_i32_131 dim 1 : vector<2x256xf32>, i32 -> vector<2x256xf32>
    %478 = vector.broadcast %112 : vector<1x256xf32> to vector<2x256xf32>
    %479 = arith.mulf %477, %478 : vector<2x256xf32>
    %c23 = arith.constant 23 : index
    %480 = memref.load %arg3[%c23] : memref<45xf32, #tpu.memory_space<smem>>
    %cst_132 = arith.constant 0.000000e+00 : f32
    %481 = vector.broadcast %cst_132 : f32 to vector<2x256xf32>
    %482 = arith.maximumf %479, %481 : vector<2x256xf32>
    %483 = vector.broadcast %480 : f32 to vector<2x256xf32>
    %484 = arith.mulf %483, %482 : vector<2x256xf32>
    %485 = arith.addf %472, %484 : vector<2x256xf32>
    %c23_133 = arith.constant 23 : index
    %486 = memref.load %arg4[%c23_133] : memref<45xf32, #tpu.memory_space<smem>>
    %487 = vector.broadcast %486 : f32 to vector<2x256xf32>
    %488 = arith.mulf %487, %479 : vector<2x256xf32>
    %489 = arith.addf %476, %488 : vector<2x256xf32>
    %c241_i32_134 = arith.constant 241 : i32
    %490 = tpu.dynamic_rotate %414 by %c241_i32_134 dim 1 : vector<2x256xf32>, i32 -> vector<2x256xf32>
    %491 = vector.broadcast %133 : vector<1x256xf32> to vector<2x256xf32>
    %492 = arith.mulf %490, %491 : vector<2x256xf32>
    %c24 = arith.constant 24 : index
    %493 = memref.load %arg3[%c24] : memref<45xf32, #tpu.memory_space<smem>>
    %cst_135 = arith.constant 0.000000e+00 : f32
    %494 = vector.broadcast %cst_135 : f32 to vector<2x256xf32>
    %495 = arith.maximumf %492, %494 : vector<2x256xf32>
    %496 = vector.broadcast %493 : f32 to vector<2x256xf32>
    %497 = arith.mulf %496, %495 : vector<2x256xf32>
    %498 = arith.addf %485, %497 : vector<2x256xf32>
    %c24_136 = arith.constant 24 : index
    %499 = memref.load %arg4[%c24_136] : memref<45xf32, #tpu.memory_space<smem>>
    %500 = vector.broadcast %499 : f32 to vector<2x256xf32>
    %501 = arith.mulf %500, %492 : vector<2x256xf32>
    %502 = arith.addf %489, %501 : vector<2x256xf32>
    %c240_i32_137 = arith.constant 240 : i32
    %503 = tpu.dynamic_rotate %414 by %c240_i32_137 dim 1 : vector<2x256xf32>, i32 -> vector<2x256xf32>
    %504 = vector.broadcast %154 : vector<1x256xf32> to vector<2x256xf32>
    %505 = arith.mulf %503, %504 : vector<2x256xf32>
    %c25 = arith.constant 25 : index
    %506 = memref.load %arg3[%c25] : memref<45xf32, #tpu.memory_space<smem>>
    %cst_138 = arith.constant 0.000000e+00 : f32
    %507 = vector.broadcast %cst_138 : f32 to vector<2x256xf32>
    %508 = arith.maximumf %505, %507 : vector<2x256xf32>
    %509 = vector.broadcast %506 : f32 to vector<2x256xf32>
    %510 = arith.mulf %509, %508 : vector<2x256xf32>
    %511 = arith.addf %498, %510 : vector<2x256xf32>
    %c25_139 = arith.constant 25 : index
    %512 = memref.load %arg4[%c25_139] : memref<45xf32, #tpu.memory_space<smem>>
    %513 = vector.broadcast %512 : f32 to vector<2x256xf32>
    %514 = arith.mulf %513, %505 : vector<2x256xf32>
    %515 = arith.addf %502, %514 : vector<2x256xf32>
    %c239_i32_140 = arith.constant 239 : i32
    %516 = tpu.dynamic_rotate %414 by %c239_i32_140 dim 1 : vector<2x256xf32>, i32 -> vector<2x256xf32>
    %517 = vector.broadcast %175 : vector<1x256xf32> to vector<2x256xf32>
    %518 = arith.mulf %516, %517 : vector<2x256xf32>
    %c26 = arith.constant 26 : index
    %519 = memref.load %arg3[%c26] : memref<45xf32, #tpu.memory_space<smem>>
    %cst_141 = arith.constant 0.000000e+00 : f32
    %520 = vector.broadcast %cst_141 : f32 to vector<2x256xf32>
    %521 = arith.maximumf %518, %520 : vector<2x256xf32>
    %522 = vector.broadcast %519 : f32 to vector<2x256xf32>
    %523 = arith.mulf %522, %521 : vector<2x256xf32>
    %524 = arith.addf %511, %523 : vector<2x256xf32>
    %c26_142 = arith.constant 26 : index
    %525 = memref.load %arg4[%c26_142] : memref<45xf32, #tpu.memory_space<smem>>
    %526 = vector.broadcast %525 : f32 to vector<2x256xf32>
    %527 = arith.mulf %526, %518 : vector<2x256xf32>
    %528 = arith.addf %515, %527 : vector<2x256xf32>
    %529 = vector.extract_strided_slice %0 {offsets = [0, 3, 0], sizes = [2, 1, 256], strides = [1, 1, 1]} : vector<2x4x256xf32> to vector<2x1x256xf32>
    %530 = vector.shape_cast %529 : vector<2x1x256xf32> to vector<2x256xf32>
    %c17_i32_143 = arith.constant 17 : i32
    %531 = tpu.dynamic_rotate %530 by %c17_i32_143 dim 1 : vector<2x256xf32>, i32 -> vector<2x256xf32>
    %532 = vector.broadcast %28 : vector<1x256xf32> to vector<2x256xf32>
    %533 = arith.mulf %531, %532 : vector<2x256xf32>
    %c27 = arith.constant 27 : index
    %534 = memref.load %arg3[%c27] : memref<45xf32, #tpu.memory_space<smem>>
    %cst_144 = arith.constant 0.000000e+00 : f32
    %535 = vector.broadcast %cst_144 : f32 to vector<2x256xf32>
    %536 = arith.maximumf %533, %535 : vector<2x256xf32>
    %537 = vector.broadcast %534 : f32 to vector<2x256xf32>
    %538 = arith.mulf %537, %536 : vector<2x256xf32>
    %539 = arith.addf %524, %538 : vector<2x256xf32>
    %c27_145 = arith.constant 27 : index
    %540 = memref.load %arg4[%c27_145] : memref<45xf32, #tpu.memory_space<smem>>
    %541 = vector.broadcast %540 : f32 to vector<2x256xf32>
    %542 = arith.mulf %541, %533 : vector<2x256xf32>
    %543 = arith.addf %528, %542 : vector<2x256xf32>
    %c16_i32_146 = arith.constant 16 : i32
    %544 = tpu.dynamic_rotate %530 by %c16_i32_146 dim 1 : vector<2x256xf32>, i32 -> vector<2x256xf32>
    %545 = vector.broadcast %49 : vector<1x256xf32> to vector<2x256xf32>
    %546 = arith.mulf %544, %545 : vector<2x256xf32>
    %c28 = arith.constant 28 : index
    %547 = memref.load %arg3[%c28] : memref<45xf32, #tpu.memory_space<smem>>
    %cst_147 = arith.constant 0.000000e+00 : f32
    %548 = vector.broadcast %cst_147 : f32 to vector<2x256xf32>
    %549 = arith.maximumf %546, %548 : vector<2x256xf32>
    %550 = vector.broadcast %547 : f32 to vector<2x256xf32>
    %551 = arith.mulf %550, %549 : vector<2x256xf32>
    %552 = arith.addf %539, %551 : vector<2x256xf32>
    %c28_148 = arith.constant 28 : index
    %553 = memref.load %arg4[%c28_148] : memref<45xf32, #tpu.memory_space<smem>>
    %554 = vector.broadcast %553 : f32 to vector<2x256xf32>
    %555 = arith.mulf %554, %546 : vector<2x256xf32>
    %556 = arith.addf %543, %555 : vector<2x256xf32>
    %c15_i32_149 = arith.constant 15 : i32
    %557 = tpu.dynamic_rotate %530 by %c15_i32_149 dim 1 : vector<2x256xf32>, i32 -> vector<2x256xf32>
    %558 = vector.broadcast %70 : vector<1x256xf32> to vector<2x256xf32>
    %559 = arith.mulf %557, %558 : vector<2x256xf32>
    %c29 = arith.constant 29 : index
    %560 = memref.load %arg3[%c29] : memref<45xf32, #tpu.memory_space<smem>>
    %cst_150 = arith.constant 0.000000e+00 : f32
    %561 = vector.broadcast %cst_150 : f32 to vector<2x256xf32>
    %562 = arith.maximumf %559, %561 : vector<2x256xf32>
    %563 = vector.broadcast %560 : f32 to vector<2x256xf32>
    %564 = arith.mulf %563, %562 : vector<2x256xf32>
    %565 = arith.addf %552, %564 : vector<2x256xf32>
    %c29_151 = arith.constant 29 : index
    %566 = memref.load %arg4[%c29_151] : memref<45xf32, #tpu.memory_space<smem>>
    %567 = vector.broadcast %566 : f32 to vector<2x256xf32>
    %568 = arith.mulf %567, %559 : vector<2x256xf32>
    %569 = arith.addf %556, %568 : vector<2x256xf32>
    %c1_i32_152 = arith.constant 1 : i32
    %570 = tpu.dynamic_rotate %530 by %c1_i32_152 dim 1 : vector<2x256xf32>, i32 -> vector<2x256xf32>
    %571 = vector.broadcast %91 : vector<1x256xf32> to vector<2x256xf32>
    %572 = arith.mulf %570, %571 : vector<2x256xf32>
    %c30 = arith.constant 30 : index
    %573 = memref.load %arg3[%c30] : memref<45xf32, #tpu.memory_space<smem>>
    %cst_153 = arith.constant 0.000000e+00 : f32
    %574 = vector.broadcast %cst_153 : f32 to vector<2x256xf32>
    %575 = arith.maximumf %572, %574 : vector<2x256xf32>
    %576 = vector.broadcast %573 : f32 to vector<2x256xf32>
    %577 = arith.mulf %576, %575 : vector<2x256xf32>
    %578 = arith.addf %565, %577 : vector<2x256xf32>
    %c30_154 = arith.constant 30 : index
    %579 = memref.load %arg4[%c30_154] : memref<45xf32, #tpu.memory_space<smem>>
    %580 = vector.broadcast %579 : f32 to vector<2x256xf32>
    %581 = arith.mulf %580, %572 : vector<2x256xf32>
    %582 = arith.addf %569, %581 : vector<2x256xf32>
    %c31 = arith.constant 31 : index
    %583 = memref.load %arg3[%c31] : memref<45xf32, #tpu.memory_space<smem>>
    %cst_155 = arith.constant 0.000000e+00 : f32
    %584 = vector.broadcast %cst_155 : f32 to vector<2x256xf32>
    %585 = arith.maximumf %530, %584 : vector<2x256xf32>
    %586 = vector.broadcast %583 : f32 to vector<2x256xf32>
    %587 = arith.mulf %586, %585 : vector<2x256xf32>
    %588 = arith.addf %578, %587 : vector<2x256xf32>
    %c31_156 = arith.constant 31 : index
    %589 = memref.load %arg4[%c31_156] : memref<45xf32, #tpu.memory_space<smem>>
    %590 = vector.broadcast %589 : f32 to vector<2x256xf32>
    %591 = arith.mulf %590, %530 : vector<2x256xf32>
    %592 = arith.addf %582, %591 : vector<2x256xf32>
    %c255_i32_157 = arith.constant 255 : i32
    %593 = tpu.dynamic_rotate %530 by %c255_i32_157 dim 1 : vector<2x256xf32>, i32 -> vector<2x256xf32>
    %594 = vector.broadcast %112 : vector<1x256xf32> to vector<2x256xf32>
    %595 = arith.mulf %593, %594 : vector<2x256xf32>
    %c32 = arith.constant 32 : index
    %596 = memref.load %arg3[%c32] : memref<45xf32, #tpu.memory_space<smem>>
    %cst_158 = arith.constant 0.000000e+00 : f32
    %597 = vector.broadcast %cst_158 : f32 to vector<2x256xf32>
    %598 = arith.maximumf %595, %597 : vector<2x256xf32>
    %599 = vector.broadcast %596 : f32 to vector<2x256xf32>
    %600 = arith.mulf %599, %598 : vector<2x256xf32>
    %601 = arith.addf %588, %600 : vector<2x256xf32>
    %c32_159 = arith.constant 32 : index
    %602 = memref.load %arg4[%c32_159] : memref<45xf32, #tpu.memory_space<smem>>
    %603 = vector.broadcast %602 : f32 to vector<2x256xf32>
    %604 = arith.mulf %603, %595 : vector<2x256xf32>
    %605 = arith.addf %592, %604 : vector<2x256xf32>
    %c241_i32_160 = arith.constant 241 : i32
    %606 = tpu.dynamic_rotate %530 by %c241_i32_160 dim 1 : vector<2x256xf32>, i32 -> vector<2x256xf32>
    %607 = vector.broadcast %133 : vector<1x256xf32> to vector<2x256xf32>
    %608 = arith.mulf %606, %607 : vector<2x256xf32>
    %c33 = arith.constant 33 : index
    %609 = memref.load %arg3[%c33] : memref<45xf32, #tpu.memory_space<smem>>
    %cst_161 = arith.constant 0.000000e+00 : f32
    %610 = vector.broadcast %cst_161 : f32 to vector<2x256xf32>
    %611 = arith.maximumf %608, %610 : vector<2x256xf32>
    %612 = vector.broadcast %609 : f32 to vector<2x256xf32>
    %613 = arith.mulf %612, %611 : vector<2x256xf32>
    %614 = arith.addf %601, %613 : vector<2x256xf32>
    %c33_162 = arith.constant 33 : index
    %615 = memref.load %arg4[%c33_162] : memref<45xf32, #tpu.memory_space<smem>>
    %616 = vector.broadcast %615 : f32 to vector<2x256xf32>
    %617 = arith.mulf %616, %608 : vector<2x256xf32>
    %618 = arith.addf %605, %617 : vector<2x256xf32>
    %c240_i32_163 = arith.constant 240 : i32
    %619 = tpu.dynamic_rotate %530 by %c240_i32_163 dim 1 : vector<2x256xf32>, i32 -> vector<2x256xf32>
    %620 = vector.broadcast %154 : vector<1x256xf32> to vector<2x256xf32>
    %621 = arith.mulf %619, %620 : vector<2x256xf32>
    %c34 = arith.constant 34 : index
    %622 = memref.load %arg3[%c34] : memref<45xf32, #tpu.memory_space<smem>>
    %cst_164 = arith.constant 0.000000e+00 : f32
    %623 = vector.broadcast %cst_164 : f32 to vector<2x256xf32>
    %624 = arith.maximumf %621, %623 : vector<2x256xf32>
    %625 = vector.broadcast %622 : f32 to vector<2x256xf32>
    %626 = arith.mulf %625, %624 : vector<2x256xf32>
    %627 = arith.addf %614, %626 : vector<2x256xf32>
    %c34_165 = arith.constant 34 : index
    %628 = memref.load %arg4[%c34_165] : memref<45xf32, #tpu.memory_space<smem>>
    %629 = vector.broadcast %628 : f32 to vector<2x256xf32>
    %630 = arith.mulf %629, %621 : vector<2x256xf32>
    %631 = arith.addf %618, %630 : vector<2x256xf32>
    %c239_i32_166 = arith.constant 239 : i32
    %632 = tpu.dynamic_rotate %530 by %c239_i32_166 dim 1 : vector<2x256xf32>, i32 -> vector<2x256xf32>
    %633 = vector.broadcast %175 : vector<1x256xf32> to vector<2x256xf32>
    %634 = arith.mulf %632, %633 : vector<2x256xf32>
    %c35 = arith.constant 35 : index
    %635 = memref.load %arg3[%c35] : memref<45xf32, #tpu.memory_space<smem>>
    %cst_167 = arith.constant 0.000000e+00 : f32
    %636 = vector.broadcast %cst_167 : f32 to vector<2x256xf32>
    %637 = arith.maximumf %634, %636 : vector<2x256xf32>
    %638 = vector.broadcast %635 : f32 to vector<2x256xf32>
    %639 = arith.mulf %638, %637 : vector<2x256xf32>
    %640 = arith.addf %627, %639 : vector<2x256xf32>
    %c35_168 = arith.constant 35 : index
    %641 = memref.load %arg4[%c35_168] : memref<45xf32, #tpu.memory_space<smem>>
    %642 = vector.broadcast %641 : f32 to vector<2x256xf32>
    %643 = arith.mulf %642, %634 : vector<2x256xf32>
    %644 = arith.addf %631, %643 : vector<2x256xf32>
    %c17_i32_169 = arith.constant 17 : i32
    %645 = tpu.dynamic_rotate %2 by %c17_i32_169 dim 1 : vector<2x256xf32>, i32 -> vector<2x256xf32>
    %646 = vector.broadcast %28 : vector<1x256xf32> to vector<2x256xf32>
    %647 = arith.mulf %645, %646 : vector<2x256xf32>
    %c36 = arith.constant 36 : index
    %648 = memref.load %arg3[%c36] : memref<45xf32, #tpu.memory_space<smem>>
    %cst_170 = arith.constant 0.000000e+00 : f32
    %649 = vector.broadcast %cst_170 : f32 to vector<2x256xf32>
    %650 = arith.maximumf %647, %649 : vector<2x256xf32>
    %651 = vector.broadcast %648 : f32 to vector<2x256xf32>
    %652 = arith.mulf %651, %650 : vector<2x256xf32>
    %653 = arith.addf %640, %652 : vector<2x256xf32>
    %c36_171 = arith.constant 36 : index
    %654 = memref.load %arg4[%c36_171] : memref<45xf32, #tpu.memory_space<smem>>
    %655 = vector.broadcast %654 : f32 to vector<2x256xf32>
    %656 = arith.mulf %655, %647 : vector<2x256xf32>
    %657 = arith.addf %644, %656 : vector<2x256xf32>
    %c16_i32_172 = arith.constant 16 : i32
    %658 = tpu.dynamic_rotate %2 by %c16_i32_172 dim 1 : vector<2x256xf32>, i32 -> vector<2x256xf32>
    %659 = vector.broadcast %49 : vector<1x256xf32> to vector<2x256xf32>
    %660 = arith.mulf %658, %659 : vector<2x256xf32>
    %c37 = arith.constant 37 : index
    %661 = memref.load %arg3[%c37] : memref<45xf32, #tpu.memory_space<smem>>
    %cst_173 = arith.constant 0.000000e+00 : f32
    %662 = vector.broadcast %cst_173 : f32 to vector<2x256xf32>
    %663 = arith.maximumf %660, %662 : vector<2x256xf32>
    %664 = vector.broadcast %661 : f32 to vector<2x256xf32>
    %665 = arith.mulf %664, %663 : vector<2x256xf32>
    %666 = arith.addf %653, %665 : vector<2x256xf32>
    %c37_174 = arith.constant 37 : index
    %667 = memref.load %arg4[%c37_174] : memref<45xf32, #tpu.memory_space<smem>>
    %668 = vector.broadcast %667 : f32 to vector<2x256xf32>
    %669 = arith.mulf %668, %660 : vector<2x256xf32>
    %670 = arith.addf %657, %669 : vector<2x256xf32>
    %c15_i32_175 = arith.constant 15 : i32
    %671 = tpu.dynamic_rotate %2 by %c15_i32_175 dim 1 : vector<2x256xf32>, i32 -> vector<2x256xf32>
    %672 = vector.broadcast %70 : vector<1x256xf32> to vector<2x256xf32>
    %673 = arith.mulf %671, %672 : vector<2x256xf32>
    %c38 = arith.constant 38 : index
    %674 = memref.load %arg3[%c38] : memref<45xf32, #tpu.memory_space<smem>>
    %cst_176 = arith.constant 0.000000e+00 : f32
    %675 = vector.broadcast %cst_176 : f32 to vector<2x256xf32>
    %676 = arith.maximumf %673, %675 : vector<2x256xf32>
    %677 = vector.broadcast %674 : f32 to vector<2x256xf32>
    %678 = arith.mulf %677, %676 : vector<2x256xf32>
    %679 = arith.addf %666, %678 : vector<2x256xf32>
    %c38_177 = arith.constant 38 : index
    %680 = memref.load %arg4[%c38_177] : memref<45xf32, #tpu.memory_space<smem>>
    %681 = vector.broadcast %680 : f32 to vector<2x256xf32>
    %682 = arith.mulf %681, %673 : vector<2x256xf32>
    %683 = arith.addf %670, %682 : vector<2x256xf32>
    %c1_i32_178 = arith.constant 1 : i32
    %684 = tpu.dynamic_rotate %2 by %c1_i32_178 dim 1 : vector<2x256xf32>, i32 -> vector<2x256xf32>
    %685 = vector.broadcast %91 : vector<1x256xf32> to vector<2x256xf32>
    %686 = arith.mulf %684, %685 : vector<2x256xf32>
    %c39 = arith.constant 39 : index
    %687 = memref.load %arg3[%c39] : memref<45xf32, #tpu.memory_space<smem>>
    %cst_179 = arith.constant 0.000000e+00 : f32
    %688 = vector.broadcast %cst_179 : f32 to vector<2x256xf32>
    %689 = arith.maximumf %686, %688 : vector<2x256xf32>
    %690 = vector.broadcast %687 : f32 to vector<2x256xf32>
    %691 = arith.mulf %690, %689 : vector<2x256xf32>
    %692 = arith.addf %679, %691 : vector<2x256xf32>
    %c39_180 = arith.constant 39 : index
    %693 = memref.load %arg4[%c39_180] : memref<45xf32, #tpu.memory_space<smem>>
    %694 = vector.broadcast %693 : f32 to vector<2x256xf32>
    %695 = arith.mulf %694, %686 : vector<2x256xf32>
    %696 = arith.addf %683, %695 : vector<2x256xf32>
    %c40 = arith.constant 40 : index
    %697 = memref.load %arg3[%c40] : memref<45xf32, #tpu.memory_space<smem>>
    %cst_181 = arith.constant 0.000000e+00 : f32
    %698 = vector.broadcast %cst_181 : f32 to vector<2x256xf32>
    %699 = arith.maximumf %2, %698 : vector<2x256xf32>
    %700 = vector.broadcast %697 : f32 to vector<2x256xf32>
    %701 = arith.mulf %700, %699 : vector<2x256xf32>
    %702 = arith.addf %692, %701 : vector<2x256xf32>
    %c40_182 = arith.constant 40 : index
    %703 = memref.load %arg4[%c40_182] : memref<45xf32, #tpu.memory_space<smem>>
    %704 = vector.broadcast %703 : f32 to vector<2x256xf32>
    %705 = arith.mulf %704, %2 : vector<2x256xf32>
    %706 = arith.addf %696, %705 : vector<2x256xf32>
    %c255_i32_183 = arith.constant 255 : i32
    %707 = tpu.dynamic_rotate %2 by %c255_i32_183 dim 1 : vector<2x256xf32>, i32 -> vector<2x256xf32>
    %708 = vector.broadcast %112 : vector<1x256xf32> to vector<2x256xf32>
    %709 = arith.mulf %707, %708 : vector<2x256xf32>
    %c41 = arith.constant 41 : index
    %710 = memref.load %arg3[%c41] : memref<45xf32, #tpu.memory_space<smem>>
    %cst_184 = arith.constant 0.000000e+00 : f32
    %711 = vector.broadcast %cst_184 : f32 to vector<2x256xf32>
    %712 = arith.maximumf %709, %711 : vector<2x256xf32>
    %713 = vector.broadcast %710 : f32 to vector<2x256xf32>
    %714 = arith.mulf %713, %712 : vector<2x256xf32>
    %715 = arith.addf %702, %714 : vector<2x256xf32>
    %c41_185 = arith.constant 41 : index
    %716 = memref.load %arg4[%c41_185] : memref<45xf32, #tpu.memory_space<smem>>
    %717 = vector.broadcast %716 : f32 to vector<2x256xf32>
    %718 = arith.mulf %717, %709 : vector<2x256xf32>
    %719 = arith.addf %706, %718 : vector<2x256xf32>
    %c241_i32_186 = arith.constant 241 : i32
    %720 = tpu.dynamic_rotate %2 by %c241_i32_186 dim 1 : vector<2x256xf32>, i32 -> vector<2x256xf32>
    %721 = vector.broadcast %133 : vector<1x256xf32> to vector<2x256xf32>
    %722 = arith.mulf %720, %721 : vector<2x256xf32>
    %c42 = arith.constant 42 : index
    %723 = memref.load %arg3[%c42] : memref<45xf32, #tpu.memory_space<smem>>
    %cst_187 = arith.constant 0.000000e+00 : f32
    %724 = vector.broadcast %cst_187 : f32 to vector<2x256xf32>
    %725 = arith.maximumf %722, %724 : vector<2x256xf32>
    %726 = vector.broadcast %723 : f32 to vector<2x256xf32>
    %727 = arith.mulf %726, %725 : vector<2x256xf32>
    %728 = arith.addf %715, %727 : vector<2x256xf32>
    %c42_188 = arith.constant 42 : index
    %729 = memref.load %arg4[%c42_188] : memref<45xf32, #tpu.memory_space<smem>>
    %730 = vector.broadcast %729 : f32 to vector<2x256xf32>
    %731 = arith.mulf %730, %722 : vector<2x256xf32>
    %732 = arith.addf %719, %731 : vector<2x256xf32>
    %c240_i32_189 = arith.constant 240 : i32
    %733 = tpu.dynamic_rotate %2 by %c240_i32_189 dim 1 : vector<2x256xf32>, i32 -> vector<2x256xf32>
    %734 = vector.broadcast %154 : vector<1x256xf32> to vector<2x256xf32>
    %735 = arith.mulf %733, %734 : vector<2x256xf32>
    %c43 = arith.constant 43 : index
    %736 = memref.load %arg3[%c43] : memref<45xf32, #tpu.memory_space<smem>>
    %cst_190 = arith.constant 0.000000e+00 : f32
    %737 = vector.broadcast %cst_190 : f32 to vector<2x256xf32>
    %738 = arith.maximumf %735, %737 : vector<2x256xf32>
    %739 = vector.broadcast %736 : f32 to vector<2x256xf32>
    %740 = arith.mulf %739, %738 : vector<2x256xf32>
    %741 = arith.addf %728, %740 : vector<2x256xf32>
    %c43_191 = arith.constant 43 : index
    %742 = memref.load %arg4[%c43_191] : memref<45xf32, #tpu.memory_space<smem>>
    %743 = vector.broadcast %742 : f32 to vector<2x256xf32>
    %744 = arith.mulf %743, %735 : vector<2x256xf32>
    %745 = arith.addf %732, %744 : vector<2x256xf32>
    %c239_i32_192 = arith.constant 239 : i32
    %746 = tpu.dynamic_rotate %2 by %c239_i32_192 dim 1 : vector<2x256xf32>, i32 -> vector<2x256xf32>
    %747 = vector.broadcast %175 : vector<1x256xf32> to vector<2x256xf32>
    %748 = arith.mulf %746, %747 : vector<2x256xf32>
    %c44 = arith.constant 44 : index
    %749 = memref.load %arg3[%c44] : memref<45xf32, #tpu.memory_space<smem>>
    %cst_193 = arith.constant 0.000000e+00 : f32
    %750 = vector.broadcast %cst_193 : f32 to vector<2x256xf32>
    %751 = arith.maximumf %748, %750 : vector<2x256xf32>
    %752 = vector.broadcast %749 : f32 to vector<2x256xf32>
    %753 = arith.mulf %752, %751 : vector<2x256xf32>
    %754 = arith.addf %741, %753 : vector<2x256xf32>
    %c44_194 = arith.constant 44 : index
    %755 = memref.load %arg4[%c44_194] : memref<45xf32, #tpu.memory_space<smem>>
    %756 = vector.broadcast %755 : f32 to vector<2x256xf32>
    %757 = arith.mulf %756, %748 : vector<2x256xf32>
    %758 = arith.addf %745, %757 : vector<2x256xf32>
    %759 = vector.broadcast %176 : f32 to vector<2x256xf32>
    %760 = arith.addf %754, %759 : vector<2x256xf32>
    %cst_195 = arith.constant 0.000000e+00 : f32
    %761 = vector.broadcast %cst_195 : f32 to vector<2x256xf32>
    %762 = arith.maximumf %760, %761 : vector<2x256xf32>
    %cst_196 = arith.constant 0.000000e+00 : f32
    %763 = vector.broadcast %cst_196 : f32 to vector<2x256xf32>
    %c17_i32_197 = arith.constant 17 : i32
    %764 = tpu.dynamic_rotate %762 by %c17_i32_197 dim 1 : vector<2x256xf32>, i32 -> vector<2x256xf32>
    %765 = vector.broadcast %28 : vector<1x256xf32> to vector<2x256xf32>
    %766 = arith.mulf %764, %765 : vector<2x256xf32>
    %c0_198 = arith.constant 0 : index
    %767 = memref.load %arg5[%c0_198] : memref<9xf32, #tpu.memory_space<smem>>
    %768 = vector.broadcast %767 : f32 to vector<2x256xf32>
    %769 = arith.mulf %768, %766 : vector<2x256xf32>
    %770 = arith.addf %763, %769 : vector<2x256xf32>
    %c16_i32_199 = arith.constant 16 : i32
    %771 = tpu.dynamic_rotate %762 by %c16_i32_199 dim 1 : vector<2x256xf32>, i32 -> vector<2x256xf32>
    %772 = vector.broadcast %49 : vector<1x256xf32> to vector<2x256xf32>
    %773 = arith.mulf %771, %772 : vector<2x256xf32>
    %c1_200 = arith.constant 1 : index
    %774 = memref.load %arg5[%c1_200] : memref<9xf32, #tpu.memory_space<smem>>
    %775 = vector.broadcast %774 : f32 to vector<2x256xf32>
    %776 = arith.mulf %775, %773 : vector<2x256xf32>
    %777 = arith.addf %770, %776 : vector<2x256xf32>
    %c15_i32_201 = arith.constant 15 : i32
    %778 = tpu.dynamic_rotate %762 by %c15_i32_201 dim 1 : vector<2x256xf32>, i32 -> vector<2x256xf32>
    %779 = vector.broadcast %70 : vector<1x256xf32> to vector<2x256xf32>
    %780 = arith.mulf %778, %779 : vector<2x256xf32>
    %c2_202 = arith.constant 2 : index
    %781 = memref.load %arg5[%c2_202] : memref<9xf32, #tpu.memory_space<smem>>
    %782 = vector.broadcast %781 : f32 to vector<2x256xf32>
    %783 = arith.mulf %782, %780 : vector<2x256xf32>
    %784 = arith.addf %777, %783 : vector<2x256xf32>
    %c1_i32_203 = arith.constant 1 : i32
    %785 = tpu.dynamic_rotate %762 by %c1_i32_203 dim 1 : vector<2x256xf32>, i32 -> vector<2x256xf32>
    %786 = vector.broadcast %91 : vector<1x256xf32> to vector<2x256xf32>
    %787 = arith.mulf %785, %786 : vector<2x256xf32>
    %c3_204 = arith.constant 3 : index
    %788 = memref.load %arg5[%c3_204] : memref<9xf32, #tpu.memory_space<smem>>
    %789 = vector.broadcast %788 : f32 to vector<2x256xf32>
    %790 = arith.mulf %789, %787 : vector<2x256xf32>
    %791 = arith.addf %784, %790 : vector<2x256xf32>
    %c4_205 = arith.constant 4 : index
    %792 = memref.load %arg5[%c4_205] : memref<9xf32, #tpu.memory_space<smem>>
    %793 = vector.broadcast %792 : f32 to vector<2x256xf32>
    %794 = arith.mulf %793, %762 : vector<2x256xf32>
    %795 = arith.addf %791, %794 : vector<2x256xf32>
    %c255_i32_206 = arith.constant 255 : i32
    %796 = tpu.dynamic_rotate %762 by %c255_i32_206 dim 1 : vector<2x256xf32>, i32 -> vector<2x256xf32>
    %797 = vector.broadcast %112 : vector<1x256xf32> to vector<2x256xf32>
    %798 = arith.mulf %796, %797 : vector<2x256xf32>
    %c5_207 = arith.constant 5 : index
    %799 = memref.load %arg5[%c5_207] : memref<9xf32, #tpu.memory_space<smem>>
    %800 = vector.broadcast %799 : f32 to vector<2x256xf32>
    %801 = arith.mulf %800, %798 : vector<2x256xf32>
    %802 = arith.addf %795, %801 : vector<2x256xf32>
    %c241_i32_208 = arith.constant 241 : i32
    %803 = tpu.dynamic_rotate %762 by %c241_i32_208 dim 1 : vector<2x256xf32>, i32 -> vector<2x256xf32>
    %804 = vector.broadcast %133 : vector<1x256xf32> to vector<2x256xf32>
    %805 = arith.mulf %803, %804 : vector<2x256xf32>
    %c6_209 = arith.constant 6 : index
    %806 = memref.load %arg5[%c6_209] : memref<9xf32, #tpu.memory_space<smem>>
    %807 = vector.broadcast %806 : f32 to vector<2x256xf32>
    %808 = arith.mulf %807, %805 : vector<2x256xf32>
    %809 = arith.addf %802, %808 : vector<2x256xf32>
    %c240_i32_210 = arith.constant 240 : i32
    %810 = tpu.dynamic_rotate %762 by %c240_i32_210 dim 1 : vector<2x256xf32>, i32 -> vector<2x256xf32>
    %811 = vector.broadcast %154 : vector<1x256xf32> to vector<2x256xf32>
    %812 = arith.mulf %810, %811 : vector<2x256xf32>
    %c7_211 = arith.constant 7 : index
    %813 = memref.load %arg5[%c7_211] : memref<9xf32, #tpu.memory_space<smem>>
    %814 = vector.broadcast %813 : f32 to vector<2x256xf32>
    %815 = arith.mulf %814, %812 : vector<2x256xf32>
    %816 = arith.addf %809, %815 : vector<2x256xf32>
    %c239_i32_212 = arith.constant 239 : i32
    %817 = tpu.dynamic_rotate %762 by %c239_i32_212 dim 1 : vector<2x256xf32>, i32 -> vector<2x256xf32>
    %818 = vector.broadcast %175 : vector<1x256xf32> to vector<2x256xf32>
    %819 = arith.mulf %817, %818 : vector<2x256xf32>
    %c8_213 = arith.constant 8 : index
    %820 = memref.load %arg5[%c8_213] : memref<9xf32, #tpu.memory_space<smem>>
    %821 = vector.broadcast %820 : f32 to vector<2x256xf32>
    %822 = arith.mulf %821, %819 : vector<2x256xf32>
    %823 = arith.addf %816, %822 : vector<2x256xf32>
    %824 = vector.broadcast %178 : f32 to vector<2x256xf32>
    %825 = arith.addf %758, %824 : vector<2x256xf32>
    %826 = vector.broadcast %177 : f32 to vector<2x256xf32>
    %827 = arith.addf %823, %826 : vector<2x256xf32>
    %828 = arith.addf %825, %827 : vector<2x256xf32>
    %829 = arith.negf %828 : vector<2x256xf32>
    %830 = math.exp %829 : vector<2x256xf32>
    %cst_214 = arith.constant 1.000000e+00 : f32
    %831 = vector.broadcast %cst_214 : f32 to vector<2x256xf32>
    %832 = arith.addf %831, %830 : vector<2x256xf32>
    %833 = arith.divf %831, %832 : vector<2x256xf32>
    %834 = vector.shape_cast %833 : vector<2x256xf32> to vector<2x1x256xf32>
    %835 = vector.broadcast %834 : vector<2x1x256xf32> to vector<2x4x256xf32>
    %836 = arith.mulf %0, %835 : vector<2x4x256xf32>
    %c0_215 = arith.constant 0 : index
    %c0_216 = arith.constant 0 : index
    %c0_217 = arith.constant 0 : index
    %837 = vector.load %arg7[%c0_215, %c0_216, %c0_217] : memref<2x4x256xf32, #tpu.memory_space<vmem>>, vector<2x4x256xf32>
    tpu.vector_store %arg7[%c0_215, %c0_216, %c0_217], %836 {strides = array<i32>} : memref<2x4x256xf32, #tpu.memory_space<vmem>>, vector<2x4x256xf32>,
    return
  }
  func.func @transform_0(%arg0: i32) -> (i32, i32, i32) {
    %c0_i32 = arith.constant 0 : i32
    %c0_i32_0 = arith.constant 0 : i32
    %c0_i32_1 = arith.constant 0 : i32
    return %arg0, %c0_i32, %c0_i32_0 : i32, i32, i32
  }
  func.func @transform_1(%arg0: i32) -> (i32, i32, i32) {
    %c0_i32 = arith.constant 0 : i32
    %c0_i32_0 = arith.constant 0 : i32
    %c0_i32_1 = arith.constant 0 : i32
    return %arg0, %c0_i32, %c0_i32_0 : i32, i32, i32
  }
  func.func @transform_2(%arg0: i32) -> i32 {
    %c0_i32 = arith.constant 0 : i32
    %c0_i32_0 = arith.constant 0 : i32
    return %c0_i32 : i32
  }
  func.func @transform_3(%arg0: i32) -> i32 {
    %c0_i32 = arith.constant 0 : i32
    %c0_i32_0 = arith.constant 0 : i32
    return %c0_i32 : i32
  }
  func.func @transform_4(%arg0: i32) -> i32 {
    %c0_i32 = arith.constant 0 : i32
    %c0_i32_0 = arith.constant 0 : i32
    return %c0_i32 : i32
  }
  func.func @transform_5(%arg0: i32) -> i32 {
    %c0_i32 = arith.constant 0 : i32
    %c0_i32_0 = arith.constant 0 : i32
    return %c0_i32 : i32
  }
  func.func @transform_6(%arg0: i32) -> (i32, i32, i32) {
    %c0_i32 = arith.constant 0 : i32
    %c0_i32_0 = arith.constant 0 : i32
    %c0_i32_1 = arith.constant 0 : i32
    return %arg0, %c0_i32, %c0_i32_0 : i32, i32, i32
  }
}

</mosaic_0001>

<llo_original>
// kernel: self_attention_pallas.1
$region0: #{self_attention_pallas.1}
  #allocation0 [shape = 'u32[]', space=smem, size = 0x4, offset = 0x4, fixed_abs, tag = 'smem constant byte address 0x4 - core index']
  #allocation1 [shape = 'u32[144,128]{1,0:T(1,128)}', space=vmem, size = 0x12000, scoped, tag = 'internal scratch']
  %s0 = inlined_call_operand.vmem [shape: f32[2,4,256], index: 0, kind: input, shape index: {}]
  %s1 = inlined_call_operand.vmem [shape: f32[2,1,256], index: 1, kind: input, shape index: {}]
  %s2 = inlined_call_operand.vmem [shape: f32[45], index: 2, kind: input, shape index: {}]
  %s3 = inlined_call_operand.vmem [shape: f32[45], index: 3, kind: input, shape index: {}]
  %s4 = inlined_call_operand.vmem [shape: f32[9], index: 4, kind: input, shape index: {}]
  %s5 = inlined_call_operand.vmem [shape: f32[3], index: 5, kind: input, shape index: {}]
  %s6 = inlined_call_operand.vmem [shape: f32[2,4,256], index: 6, kind: output, shape index: {}]
  %s7 = sld [smem:[#allocation0]]
  $region50: #{self_attention_pallas.1} parent=0
    _
  %s9 = ssub.s32 1, %s7
  %s10 = scalar_select 0, %s9, %s7
  $region1: #{self_attention_pallas.1} parent=0
    #allocation2 [shape = 'u8[512]{0}', space=smem, size = 0x200, scoped, tag = 'input window, operand 2, single buffered']
    #allocation3 [shape = 's32[1]{0}', space=sflag, size = 0x4, scoped, tag = 'scoped memory for self_attention_pallas.1']
    #allocation4 [shape = 'u8[512]{0}', space=smem, size = 0x200, scoped, tag = 'input window, operand 3, single buffered']
    #allocation5 [shape = 's32[1]{0}', space=sflag, size = 0x4, scoped, tag = 'scoped memory for self_attention_pallas.1']
    #allocation6 [shape = 'u8[512]{0}', space=smem, size = 0x200, scoped, tag = 'input window, operand 4, single buffered']
    #allocation7 [shape = 'u8[512]{0}', space=smem, size = 0x200, scoped, tag = 'input window, operand 5, single buffered']
    #allocation8 [shape = 's32[1]{0}', space=sflag, size = 0x4, scoped, tag = 'scoped memory for self_attention_pallas.1']
    %11 = vsyncpa [#allocation3], 0
    %12 = vsyncpa [#allocation5], 0
    %13 = vsyncpa [#allocation8], 0
    // Predicated region
    $region2: #{self_attention_pallas.1} parent=1 // pred_check
      _
    $region3: #{self_attention_pallas.1} parent=1 // pred_check_branch
      %15 = sbr.rel (0) target = $region5
    $region4: #{self_attention_pallas.1} parent=1 // pred_region
      _
    $region5: #{self_attention_pallas.1} parent=1 // pred_fallthru
      _
    // Predicated region
    $region6: #{self_attention_pallas.1} parent=1 // pred_check
      _
    $region7: #{self_attention_pallas.1} parent=1 // pred_check_branch
      %17 = sbr.rel (0) target = $region9
    $region8: #{self_attention_pallas.1} parent=1 // pred_region
      _
    $region9: #{self_attention_pallas.1} parent=1 // pred_fallthru
      _
    // Predicated region
    $region10: #{self_attention_pallas.1} parent=1 // pred_check
      _
    $region11: #{self_attention_pallas.1} parent=1 // pred_check_branch
      %19 = sbr.rel (0) target = $region13
    $region12: #{self_attention_pallas.1} parent=1 // pred_region
      %s21 = ssub.s32 16, 16
      %22 = vsyncadd [#allocation3], %s21
      %s24 = sshll.u32 %s2, 4
      %s25 = int_to_ptr.vmem [resolvable:$true] %s24
      %27 = dma.vmem_to_smem %s25, 16, [#allocation2], [#allocation3]
    $region13: #{self_attention_pallas.1} parent=1 // pred_fallthru
      _
    // Predicated region
    $region14: #{self_attention_pallas.1} parent=1 // pred_check
      _
    $region15: #{self_attention_pallas.1} parent=1 // pred_check_branch
      %29 = sbr.rel (0) target = $region17
    $region16: #{self_attention_pallas.1} parent=1 // pred_region
      %s31 = ssub.s32 16, 16
      %32 = vsyncadd [#allocation5], %s31
      %s34 = sshll.u32 %s3, 4
      %s35 = int_to_ptr.vmem [resolvable:$true] %s34
      %37 = dma.vmem_to_smem %s35, 16, [#allocation4], [#allocation5]
    $region17: #{self_attention_pallas.1} parent=1 // pred_fallthru
      _
    // Predicated region
    $region18: #{self_attention_pallas.1} parent=1 // pred_check
      _
    $region19: #{self_attention_pallas.1} parent=1 // pred_check_branch
      %39 = sbr.rel (0) target = $region21
    $region20: #{self_attention_pallas.1} parent=1 // pred_region
      %s41 = ssub.s32 16, 16
      %42 = vsyncadd [#allocation5], %s41
      %s44 = sshll.u32 %s4, 4
      %s45 = int_to_ptr.vmem [resolvable:$true] %s44
      %47 = dma.vmem_to_smem %s45, 16, [#allocation6], [#allocation5]
    $region21: #{self_attention_pallas.1} parent=1 // pred_fallthru
      _
    // Predicated region
    $region22: #{self_attention_pallas.1} parent=1 // pred_check
      _
    $region23: #{self_attention_pallas.1} parent=1 // pred_check_branch
      %49 = sbr.rel (0) target = $region25
    $region24: #{self_attention_pallas.1} parent=1 // pred_region
      %s51 = ssub.s32 16, 16
      %52 = vsyncadd [#allocation8], %s51
      %s54 = sshll.u32 %s5, 4
      %s55 = int_to_ptr.vmem [resolvable:$true] %s54
      %57 = dma.vmem_to_smem %s55, 16, [#allocation7], [#allocation8]
    $region25: #{self_attention_pallas.1} parent=1 // pred_fallthru
      _
    // Predicated region
    $region26: #{self_attention_pallas.1} parent=1 // pred_check
      _
    $region27: #{self_attention_pallas.1} parent=1 // pred_check_branch
      %59 = sbr.rel (0) target = $region29
    $region28: #{self_attention_pallas.1} parent=1 // pred_region
      %60 = dma.done [#allocation3], 16
    $region29: #{self_attention_pallas.1} parent=1 // pred_fallthru
      _
    // Predicated region
    $region30: #{self_attention_pallas.1} parent=1 // pred_check
      _
    $region31: #{self_attention_pallas.1} parent=1 // pred_check_branch
      %62 = sbr.rel (0) target = $region33
    $region32: #{self_attention_pallas.1} parent=1 // pred_region
      %63 = dma.done [#allocation5], 16
    $region33: #{self_attention_pallas.1} parent=1 // pred_fallthru
      _
    // Predicated region
    $region34: #{self_attention_pallas.1} parent=1 // pred_check
      _
    $region35: #{self_attention_pallas.1} parent=1 // pred_check_branch
      %65 = sbr.rel (0) target = $region37
    $region36: #{self_attention_pallas.1} parent=1 // pred_region
      %66 = dma.done [#allocation5], 16
    $region37: #{self_attention_pallas.1} parent=1 // pred_fallthru
      _
    // Predicated region
    $region38: #{self_attention_pallas.1} parent=1 // pred_check
      _
    $region39: #{self_attention_pallas.1} parent=1 // pred_check_branch
      %68 = sbr.rel (0) target = $region41
    $region40: #{self_attention_pallas.1} parent=1 // pred_region
      %69 = dma.done [#allocation8], 16
    $region41: #{self_attention_pallas.1} parent=1 // pred_fallthru
      _
    %70 = sfence
    %v71 = vld [vmem:[%s0] sm:$0xff]
    %v72 = vld [vmem:[%s0 + $0x8] sm:$0xff]
    %v73 = vld [vmem:[%s1] sm:$0x3]
    %v74 = vld [vmem:[%s1 + $0x2] sm:$0x3]
    %v75 = vlaneseq
    %v76 = vand.u32 %v75, 127
    %v77 = vadd.s32 %v76, 128
    %v78 = vshra.s32 %v76, 4
    %v79 = vshra.s32 %v77, 4
    %v80 = vand.u32 %v76, 15
    %v81 = vand.u32 %v77, 15
    %v82 = vadd.s32 %v78, 4294967295
    %v83 = vadd.s32 %v79, 4294967295
    %vm84 = vcmp.ge.s32.totalorder %v82, 0
    %vm85 = vcmp.ge.s32.totalorder %v83, 0
    %vm86 = vcmp.lt.s32.totalorder %v82, 16
    %vm87 = vcmp.lt.s32.totalorder %v83, 16
    %vm88 = vmand %vm84, %vm86
    %vm89 = vmand %vm85, %vm87
    %v90 = vadd.s32 %v80, 4294967295
    %v91 = vadd.s32 %v81, 4294967295
    %vm92 = vcmp.ge.s32.totalorder %v90, 0
    %vm93 = vcmp.ge.s32.totalorder %v91, 0
    %vm94 = vmand %vm88, %vm92
    %vm95 = vmand %vm89, %vm93
    %vm96 = vcmp.lt.s32.totalorder %v90, 16
    %vm97 = vcmp.lt.s32.totalorder %v91, 16
    %vm98 = vmand %vm94, %vm96
    %vm99 = vmand %vm95, %vm97
    %v100 = vsel %vm98, 1, 0
    %v101 = vsel %vm99, 1, 0
    %v102 = vcvt.s32.f32 %v100
    %v103 = vcvt.s32.f32 %v101
    %vm104 = vcmp.ge.s32.totalorder %v80, 0
    %vm105 = vcmp.ge.s32.totalorder %v81, 0
    %vm106 = vmand %vm88, %vm104
    %vm107 = vmand %vm89, %vm105
    %vm108 = vcmp.lt.s32.totalorder %v80, 16
    %vm109 = vcmp.lt.s32.totalorder %v81, 16
    %vm110 = vmand %vm106, %vm108
    %vm111 = vmand %vm107, %vm109
    %v112 = vsel %vm110, 1, 0
    %v113 = vsel %vm111, 1, 0
    %v114 = vcvt.s32.f32 %v112
    %v115 = vcvt.s32.f32 %v113
    %v116 = vadd.s32 %v80, 1
    %v117 = vadd.s32 %v81, 1
    %vm118 = vcmp.ge.s32.totalorder %v116, 0
    %vm119 = vcmp.ge.s32.totalorder %v117, 0
    %vm120 = vmand %vm88, %vm118
    %vm121 = vmand %vm89, %vm119
    %vm122 = vcmp.lt.s32.totalorder %v116, 16
    %vm123 = vcmp.lt.s32.totalorder %v117, 16
    %vm124 = vmand %vm120, %vm122
    %vm125 = vmand %vm121, %vm123
    %v126 = vsel %vm124, 1, 0
    %v127 = vsel %vm125, 1, 0
    %v128 = vcvt.s32.f32 %v126
    %v129 = vcvt.s32.f32 %v127
    %vm130 = vcmp.ge.s32.totalorder %v78, 0
    %vm131 = vcmp.ge.s32.totalorder %v79, 0
    %vm132 = vcmp.lt.s32.totalorder %v78, 16
    %vm133 = vcmp.lt.s32.totalorder %v79, 16
    %vm134 = vmand %vm130, %vm132
    %vm135 = vmand %vm131, %vm133
    %vm136 = vmand %vm134, %vm92
    %vm137 = vmand %vm135, %vm93
    %vm138 = vmand %vm136, %vm96
    %vm139 = vmand %vm137, %vm97
    %v140 = vsel %vm138, 1, 0
    %v141 = vsel %vm139, 1, 0
    %v142 = vcvt.s32.f32 %v140
    %v143 = vcvt.s32.f32 %v141
    %vm144 = vmand %vm134, %vm118
    %vm145 = vmand %vm135, %vm119
    %vm146 = vmand %vm144, %vm122
    %vm147 = vmand %vm145, %vm123
    %v148 = vsel %vm146, 1, 0
    %v149 = vsel %vm147, 1, 0
    %v150 = vcvt.s32.f32 %v148
    %v151 = vcvt.s32.f32 %v149
    %v152 = vadd.s32 %v78, 1
    %v153 = vadd.s32 %v79, 1
    %vm154 = vcmp.ge.s32.totalorder %v152, 0
    %vm155 = vcmp.ge.s32.totalorder %v153, 0
    %vm156 = vcmp.lt.s32.totalorder %v152, 16
    %vm157 = vcmp.lt.s32.totalorder %v153, 16
    %vm158 = vmand %vm154, %vm156
    %vm159 = vmand %vm155, %vm157
    %vm160 = vmand %vm158, %vm92
    %vm161 = vmand %vm159, %vm93
    %vm162 = vmand %vm160, %vm96
    %vm163 = vmand %vm161, %vm97
    %v164 = vsel %vm162, 1, 0
    %v165 = vsel %vm163, 1, 0
    %v166 = vcvt.s32.f32 %v164
    %v167 = vcvt.s32.f32 %v165
    %vm168 = vmand %vm158, %vm104
    %vm169 = vmand %vm159, %vm105
    %vm170 = vmand %vm168, %vm108
    %vm171 = vmand %vm169, %vm109
    %v172 = vsel %vm170, 1, 0
    %v173 = vsel %vm171, 1, 0
    %v174 = vcvt.s32.f32 %v172
    %v175 = vcvt.s32.f32 %v173
    %vm176 = vmand %vm158, %vm118
    %vm177 = vmand %vm159, %vm119
    %vm178 = vmand %vm176, %vm122
    %vm179 = vmand %vm177, %vm123
    %v180 = vsel %vm178, 1, 0
    %v181 = vsel %vm179, 1, 0
    %v182 = vcvt.s32.f32 %v180
    %v183 = vcvt.s32.f32 %v181
    %s184 = sld [smem:[#allocation7]]
    %s185 = sld [smem:[#allocation7 + $0x1]]
    %s186 = sld [smem:[#allocation7 + $0x2]]
    %v189 = vlaneseq
    %v190 = vshrl.u32 %v189, 7
    %v191 = vsub.s32 0, %v190
    %v192 = vrot.slane %v71, %v191
    %v193 = vlaneseq
    %v194 = vshrl.u32 %v193, 7
    %v195 = vsub.s32 4, %v194
    %v196 = vrot.slane %v71, %v195
    %v197 = vlaneseq
    %v198 = vshrl.u32 %v197, 7
    %v199 = vsub.s32 0, %v198
    %v200 = vrot.slane %v72, %v199
    %v201 = vlaneseq
    %v202 = vshrl.u32 %v201, 7
    %v203 = vsub.s32 4, %v202
    %v204 = vrot.slane %v72, %v203
    %vm205 = vcmask 1041409
    %v206 = vsel %vm205, %v200, %v192
    %v207 = vsel %vm205, %v204, %v196
    %210 = vrot.lane.b32.xlu0 %v206, 17
    %v211 = vpop.permute.xlu0 %210
    %212 = vrot.lane.b32.xlu0 %v207, 17
    %v213 = vpop.permute.xlu0 %212
    %vm214 = vcmp.lt.s32.totalorder %v76, 17
    %v215 = vsel %vm214, %v211, %v213
    %v216 = vsel %vm214, %v213, %v211
    %v217 = vmul.f32 %v216, %v102
    %v218 = vmul.f32 %v215, %v103
    %s219 = sld [smem:[#allocation2]]
    %v220 = vmax.f32 %v217, 0.0
    %v221 = vmax.f32 %v218, 0.0
    %v222 = vstv %s219
    %v223 = vmul.f32 %v222, %v220
    %v224 = vmul.f32 %v222, %v221
    %v225 = vadd.f32 %v223, 0.0
    %v226 = vadd.f32 %v224, 0.0
    %s227 = sld [smem:[#allocation4]]
    %v228 = vstv %s227
    %v229 = vmul.f32 %v228, %v217
    %v230 = vmul.f32 %v228, %v218
    %v231 = vadd.f32 %v229, 0.0
    %v232 = vadd.f32 %v230, 0.0
    %233 = vrot.lane.b32.xlu0 %v206, 16
    %v234 = vpop.permute.xlu0 %233
    %235 = vrot.lane.b32.xlu0 %v207, 16
    %v236 = vpop.permute.xlu0 %235
    %vm237 = vcmp.lt.s32.totalorder %v76, 16
    %v238 = vsel %vm237, %v234, %v236
    %v239 = vsel %vm237, %v236, %v234
    %v240 = vmul.f32 %v239, %v114
    %v241 = vmul.f32 %v238, %v115
    %s242 = sld [smem:[#allocation2 + $0x1]]
    %v243 = vmax.f32 %v240, 0.0
    %v244 = vmax.f32 %v241, 0.0
    %v245 = vstv %s242
    %v246 = vmul.f32 %v245, %v243
    %v247 = vmul.f32 %v245, %v244
    %v248 = vadd.f32 %v225, %v246
    %v249 = vadd.f32 %v226, %v247
    %s250 = sld [smem:[#allocation4 + $0x1]]
    %v251 = vstv %s250
    %v252 = vmul.f32 %v251, %v240
    %v253 = vmul.f32 %v251, %v241
    %v254 = vadd.f32 %v231, %v252
    %v255 = vadd.f32 %v232, %v253
    %256 = vrot.lane.b32.xlu0 %v206, 15
    %v257 = vpop.permute.xlu0 %256
    %258 = vrot.lane.b32.xlu0 %v207, 15
    %v259 = vpop.permute.xlu0 %258
    %vm260 = vcmp.lt.s32.totalorder %v76, 15
    %v261 = vsel %vm260, %v257, %v259
    %v262 = vsel %vm260, %v259, %v257
    %v263 = vmul.f32 %v262, %v128
    %v264 = vmul.f32 %v261, %v129
    %s265 = sld [smem:[#allocation2 + $0x2]]
    %v266 = vmax.f32 %v263, 0.0
    %v267 = vmax.f32 %v264, 0.0
    %v268 = vstv %s265
    %v269 = vmul.f32 %v268, %v266
    %v270 = vmul.f32 %v268, %v267
    %v271 = vadd.f32 %v248, %v269
    %v272 = vadd.f32 %v249, %v270
    %s273 = sld [smem:[#allocation4 + $0x2]]
    %v274 = vstv %s273
    %v275 = vmul.f32 %v274, %v263
    %v276 = vmul.f32 %v274, %v264
    %v277 = vadd.f32 %v254, %v275
    %v278 = vadd.f32 %v255, %v276
    %279 = vrot.lane.b32.xlu0 %v206, 1
    %v280 = vpop.permute.xlu0 %279
    %281 = vrot.lane.b32.xlu0 %v207, 1
    %v282 = vpop.permute.xlu0 %281
    %vm283 = vcmp.lt.s32.totalorder %v76, 1
    %v284 = vsel %vm283, %v280, %v282
    %v285 = vsel %vm283, %v282, %v280
    %v286 = vmul.f32 %v285, %v142
    %v287 = vmul.f32 %v284, %v143
    %s288 = sld [smem:[#allocation2 + $0x3]]
    %v289 = vmax.f32 %v286, 0.0
    %v290 = vmax.f32 %v287, 0.0
    %v291 = vstv %s288
    %v292 = vmul.f32 %v291, %v289
    %v293 = vmul.f32 %v291, %v290
    %v294 = vadd.f32 %v271, %v292
    %v295 = vadd.f32 %v272, %v293
    %s296 = sld [smem:[#allocation4 + $0x3]]
    %v297 = vstv %s296
    %v298 = vmul.f32 %v297, %v286
    %v299 = vmul.f32 %v297, %v287
    %v300 = vadd.f32 %v277, %v298
    %v301 = vadd.f32 %v278, %v299
    %s302 = sld [smem:[#allocation2 + $0x4]]
    %v303 = vmax.f32 %v71, 0.0
    %v304 = vmax.f32 %v72, 0.0
    %v305 = vstv %s302
    %v306 = vmul.f32 %v305, %v303
    %v307 = vmul.f32 %v305, %v304
    %v310 = vlaneseq
    %v311 = vshrl.u32 %v310, 7
    %v312 = vsub.s32 0, %v311
    %v313 = vrot.slane %v306, %v312
    %v314 = vlaneseq
    %v315 = vshrl.u32 %v314, 7
    %v316 = vsub.s32 4, %v315
    %v317 = vrot.slane %v306, %v316
    %v318 = vlaneseq
    %v319 = vshrl.u32 %v318, 7
    %v320 = vsub.s32 0, %v319
    %v321 = vrot.slane %v307, %v320
    %v322 = vlaneseq
    %v323 = vshrl.u32 %v322, 7
    %v324 = vsub.s32 4, %v323
    %v325 = vrot.slane %v307, %v324
    %v326 = vsel %vm205, %v321, %v313
    %v327 = vsel %vm205, %v325, %v317
    %v330 = vadd.f32 %v294, %v326
    %v331 = vadd.f32 %v295, %v327
    %s332 = sld [smem:[#allocation4 + $0x4]]
    %v333 = vstv %s332
    %v334 = vmul.f32 %v333, %v71
    %v335 = vmul.f32 %v333, %v72
    %v338 = vlaneseq
    %v339 = vshrl.u32 %v338, 7
    %v340 = vsub.s32 0, %v339
    %v341 = vrot.slane %v334, %v340
    %v342 = vlaneseq
    %v343 = vshrl.u32 %v342, 7
    %v344 = vsub.s32 4, %v343
    %v345 = vrot.slane %v334, %v344
    %v346 = vlaneseq
    %v347 = vshrl.u32 %v346, 7
    %v348 = vsub.s32 0, %v347
    %v349 = vrot.slane %v335, %v348
    %v350 = vlaneseq
    %v351 = vshrl.u32 %v350, 7
    %v352 = vsub.s32 4, %v351
    %v353 = vrot.slane %v335, %v352
    %v354 = vsel %vm205, %v349, %v341
    %v355 = vsel %vm205, %v353, %v345
    %v358 = vadd.f32 %v300, %v354
    %v359 = vadd.f32 %v301, %v355
    %360 = vrot.lane.b32.xlu0 %v206, 127
    %v361 = vpop.permute.xlu0 %360
    %362 = vrot.lane.b32.xlu0 %v207, 127
    %v363 = vpop.permute.xlu0 %362
    %vm364 = vcmp.lt.s32.totalorder %v76, 127
    %v365 = vsel %vm364, %v361, %v363
    %v366 = vsel %vm364, %v363, %v361
    %v367 = vmul.f32 %v365, %v150
    %v368 = vmul.f32 %v366, %v151
    %s369 = sld [smem:[#allocation2 + $0x5]]
    %v370 = vmax.f32 %v367, 0.0
    %v371 = vmax.f32 %v368, 0.0
    %v372 = vstv %s369
    %v373 = vmul.f32 %v372, %v370
    %v374 = vmul.f32 %v372, %v371
    %v375 = vadd.f32 %v330, %v373
    %v376 = vadd.f32 %v331, %v374
    %s377 = sld [smem:[#allocation4 + $0x5]]
    %v378 = vstv %s377
    %v379 = vmul.f32 %v378, %v367
    %v380 = vmul.f32 %v378, %v368
    %v381 = vadd.f32 %v358, %v379
    %v382 = vadd.f32 %v359, %v380
    %383 = vrot.lane.b32.xlu0 %v206, 113
    %v384 = vpop.permute.xlu0 %383
    %385 = vrot.lane.b32.xlu0 %v207, 113
    %v386 = vpop.permute.xlu0 %385
    %vm387 = vcmp.lt.s32.totalorder %v76, 113
    %v388 = vsel %vm387, %v384, %v386
    %v389 = vsel %vm387, %v386, %v384
    %v390 = vmul.f32 %v388, %v166
    %v391 = vmul.f32 %v389, %v167
    %s392 = sld [smem:[#allocation2 + $0x6]]
    %v393 = vmax.f32 %v390, 0.0
    %v394 = vmax.f32 %v391, 0.0
    %v395 = vstv %s392
    %v396 = vmul.f32 %v395, %v393
    %v397 = vmul.f32 %v395, %v394
    %v398 = vadd.f32 %v375, %v396
    %v399 = vadd.f32 %v376, %v397
    %s400 = sld [smem:[#allocation4 + $0x6]]
    %v401 = vstv %s400
    %v402 = vmul.f32 %v401, %v390
    %v403 = vmul.f32 %v401, %v391
    %v404 = vadd.f32 %v381, %v402
    %v405 = vadd.f32 %v382, %v403
    %406 = vrot.lane.b32.xlu0 %v206, 112
    %v407 = vpop.permute.xlu0 %406
    %408 = vrot.lane.b32.xlu0 %v207, 112
    %v409 = vpop.permute.xlu0 %408
    %vm410 = vcmp.lt.s32.totalorder %v76, 112
    %v411 = vsel %vm410, %v407, %v409
    %v412 = vsel %vm410, %v409, %v407
    %v413 = vmul.f32 %v411, %v174
    %v414 = vmul.f32 %v412, %v175
    %s415 = sld [smem:[#allocation2 + $0x7]]
    %v416 = vmax.f32 %v413, 0.0
    %v417 = vmax.f32 %v414, 0.0
    %v418 = vstv %s415
    %v419 = vmul.f32 %v418, %v416
    %v420 = vmul.f32 %v418, %v417
    %v421 = vadd.f32 %v398, %v419
    %v422 = vadd.f32 %v399, %v420
    %s423 = sld [smem:[#allocation4 + $0x7]]
    %v424 = vstv %s423
    %v425 = vmul.f32 %v424, %v413
    %v426 = vmul.f32 %v424, %v414
    %v427 = vadd.f32 %v404, %v425
    %v428 = vadd.f32 %v405, %v426
    %429 = vrot.lane.b32.xlu0 %v206, 111
    %v430 = vpop.permute.xlu0 %429
    %431 = vrot.lane.b32.xlu0 %v207, 111
    %v432 = vpop.permute.xlu0 %431
    %vm433 = vcmp.lt.s32.totalorder %v76, 111
    %v434 = vsel %vm433, %v430, %v432
    %v435 = vsel %vm433, %v432, %v430
    %v436 = vmul.f32 %v434, %v182
    %v437 = vmul.f32 %v435, %v183
    %s438 = sld [smem:[#allocation2 + $0x8]]
    %v439 = vmax.f32 %v436, 0.0
    %v440 = vmax.f32 %v437, 0.0
    %v441 = vstv %s438
    %v442 = vmul.f32 %v441, %v439
    %v443 = vmul.f32 %v441, %v440
    %v444 = vadd.f32 %v421, %v442
    %v445 = vadd.f32 %v422, %v443
    %s446 = sld [smem:[#allocation4 + $0x8]]
    %v447 = vstv %s446
    %v448 = vmul.f32 %v447, %v436
    %v449 = vmul.f32 %v447, %v437
    %v450 = vadd.f32 %v427, %v448
    %v451 = vadd.f32 %v428, %v449
    %v452 = vlaneseq
    %v453 = vshrl.u32 %v452, 7
    %v454 = vsub.s32 1, %v453
    %v455 = vrot.slane %v71, %v454
    %v456 = vlaneseq
    %v457 = vshrl.u32 %v456, 7
    %v458 = vsub.s32 5, %v457
    %v459 = vrot.slane %v71, %v458
    %v460 = vlaneseq
    %v461 = vshrl.u32 %v460, 7
    %v462 = vsub.s32 1, %v461
    %v463 = vrot.slane %v72, %v462
    %v464 = vlaneseq
    %v465 = vshrl.u32 %v464, 7
    %v466 = vsub.s32 5, %v465
    %v467 = vrot.slane %v72, %v466
    %v468 = vsel %vm205, %v463, %v455
    %v469 = vsel %vm205, %v467, %v459
    %472 = vrot.lane.b32.xlu0 %v468, 17
    %v473 = vpop.permute.xlu0 %472
    %474 = vrot.lane.b32.xlu0 %v469, 17
    %v475 = vpop.permute.xlu0 %474
    %v476 = vsel %vm214, %v473, %v475
    %v477 = vsel %vm214, %v475, %v473
    %v478 = vmul.f32 %v477, %v102
    %v479 = vmul.f32 %v476, %v103
    %s480 = sld [smem:[#allocation2 + $0x9]]
    %v481 = vmax.f32 %v478, 0.0
    %v482 = vmax.f32 %v479, 0.0
    %v483 = vstv %s480
    %v484 = vmul.f32 %v483, %v481
    %v485 = vmul.f32 %v483, %v482
    %v486 = vadd.f32 %v444, %v484
    %v487 = vadd.f32 %v445, %v485
    %s488 = sld [smem:[#allocation4 + $0x9]]
    %v489 = vstv %s488
    %v490 = vmul.f32 %v489, %v478
    %v491 = vmul.f32 %v489, %v479
    %v492 = vadd.f32 %v450, %v490
    %v493 = vadd.f32 %v451, %v491
    %494 = vrot.lane.b32.xlu0 %v468, 16
    %v495 = vpop.permute.xlu0 %494
    %496 = vrot.lane.b32.xlu0 %v469, 16
    %v497 = vpop.permute.xlu0 %496
    %v498 = vsel %vm237, %v495, %v497
    %v499 = vsel %vm237, %v497, %v495
    %v500 = vmul.f32 %v499, %v114
    %v501 = vmul.f32 %v498, %v115
    %s502 = sld [smem:[#allocation2 + $0xa]]
    %v503 = vmax.f32 %v500, 0.0
    %v504 = vmax.f32 %v501, 0.0
    %v505 = vstv %s502
    %v506 = vmul.f32 %v505, %v503
    %v507 = vmul.f32 %v505, %v504
    %v508 = vadd.f32 %v486, %v506
    %v509 = vadd.f32 %v487, %v507
    %s510 = sld [smem:[#allocation4 + $0xa]]
    %v511 = vstv %s510
    %v512 = vmul.f32 %v511, %v500
    %v513 = vmul.f32 %v511, %v501
    %v514 = vadd.f32 %v492, %v512
    %v515 = vadd.f32 %v493, %v513
    %516 = vrot.lane.b32.xlu0 %v468, 15
    %v517 = vpop.permute.xlu0 %516
    %518 = vrot.lane.b32.xlu0 %v469, 15
    %v519 = vpop.permute.xlu0 %518
    %v520 = vsel %vm260, %v517, %v519
    %v521 = vsel %vm260, %v519, %v517
    %v522 = vmul.f32 %v521, %v128
    %v523 = vmul.f32 %v520, %v129
    %s524 = sld [smem:[#allocation2 + $0xb]]
    %v525 = vmax.f32 %v522, 0.0
    %v526 = vmax.f32 %v523, 0.0
    %v527 = vstv %s524
    %v528 = vmul.f32 %v527, %v525
    %v529 = vmul.f32 %v527, %v526
    %v530 = vadd.f32 %v508, %v528
    %v531 = vadd.f32 %v509, %v529
    %s532 = sld [smem:[#allocation4 + $0xb]]
    %v533 = vstv %s532
    %v534 = vmul.f32 %v533, %v522
    %v535 = vmul.f32 %v533, %v523
    %v536 = vadd.f32 %v514, %v534
    %v537 = vadd.f32 %v515, %v535
    %538 = vrot.lane.b32.xlu0 %v468, 1
    %v539 = vpop.permute.xlu0 %538
    %540 = vrot.lane.b32.xlu0 %v469, 1
    %v541 = vpop.permute.xlu0 %540
    %v542 = vsel %vm283, %v539, %v541
    %v543 = vsel %vm283, %v541, %v539
    %v544 = vmul.f32 %v543, %v142
    %v545 = vmul.f32 %v542, %v143
    %s546 = sld [smem:[#allocation2 + $0xc]]
    %v547 = vmax.f32 %v544, 0.0
    %v548 = vmax.f32 %v545, 0.0
    %v549 = vstv %s546
    %v550 = vmul.f32 %v549, %v547
    %v551 = vmul.f32 %v549, %v548
    %v552 = vadd.f32 %v530, %v550
    %v553 = vadd.f32 %v531, %v551
    %s554 = sld [smem:[#allocation4 + $0xc]]
    %v555 = vstv %s554
    %v556 = vmul.f32 %v555, %v544
    %v557 = vmul.f32 %v555, %v545
    %v558 = vadd.f32 %v536, %v556
    %v559 = vadd.f32 %v537, %v557
    %s560 = sld [smem:[#allocation2 + $0xd]]
    %v561 = vstv %s560
    %v562 = vmul.f32 %v561, %v303
    %v563 = vmul.f32 %v561, %v304
    %v566 = vlaneseq
    %v567 = vshrl.u32 %v566, 7
    %v568 = vsub.s32 1, %v567
    %v569 = vrot.slane %v562, %v568
    %v570 = vlaneseq
    %v571 = vshrl.u32 %v570, 7
    %v572 = vsub.s32 5, %v571
    %v573 = vrot.slane %v562, %v572
    %v574 = vlaneseq
    %v575 = vshrl.u32 %v574, 7
    %v576 = vsub.s32 1, %v575
    %v577 = vrot.slane %v563, %v576
    %v578 = vlaneseq
    %v579 = vshrl.u32 %v578, 7
    %v580 = vsub.s32 5, %v579
    %v581 = vrot.slane %v563, %v580
    %v582 = vsel %vm205, %v577, %v569
    %v583 = vsel %vm205, %v581, %v573
    %v586 = vadd.f32 %v552, %v582
    %v587 = vadd.f32 %v553, %v583
    %s588 = sld [smem:[#allocation4 + $0xd]]
    %v589 = vstv %s588
    %v590 = vmul.f32 %v589, %v71
    %v591 = vmul.f32 %v589, %v72
    %v594 = vlaneseq
    %v595 = vshrl.u32 %v594, 7
    %v596 = vsub.s32 1, %v595
    %v597 = vrot.slane %v590, %v596
    %v598 = vlaneseq
    %v599 = vshrl.u32 %v598, 7
    %v600 = vsub.s32 5, %v599
    %v601 = vrot.slane %v590, %v600
    %v602 = vlaneseq
    %v603 = vshrl.u32 %v602, 7
    %v604 = vsub.s32 1, %v603
    %v605 = vrot.slane %v591, %v604
    %v606 = vlaneseq
    %v607 = vshrl.u32 %v606, 7
    %v608 = vsub.s32 5, %v607
    %v609 = vrot.slane %v591, %v608
    %v610 = vsel %vm205, %v605, %v597
    %v611 = vsel %vm205, %v609, %v601
    %v614 = vadd.f32 %v558, %v610
    %v615 = vadd.f32 %v559, %v611
    %616 = vrot.lane.b32.xlu0 %v468, 127
    %v617 = vpop.permute.xlu0 %616
    %618 = vrot.lane.b32.xlu0 %v469, 127
    %v619 = vpop.permute.xlu0 %618
    %v620 = vsel %vm364, %v617, %v619
    %v621 = vsel %vm364, %v619, %v617
    %v622 = vmul.f32 %v620, %v150
    %v623 = vmul.f32 %v621, %v151
    %s624 = sld [smem:[#allocation2 + $0xe]]
    %v625 = vmax.f32 %v622, 0.0
    %v626 = vmax.f32 %v623, 0.0
    %v627 = vstv %s624
    %v628 = vmul.f32 %v627, %v625
    %v629 = vmul.f32 %v627, %v626
    %v630 = vadd.f32 %v586, %v628
    %v631 = vadd.f32 %v587, %v629
    %s632 = sld [smem:[#allocation4 + $0xe]]
    %v633 = vstv %s632
    %v634 = vmul.f32 %v633, %v622
    %v635 = vmul.f32 %v633, %v623
    %v636 = vadd.f32 %v614, %v634
    %v637 = vadd.f32 %v615, %v635
    %638 = vrot.lane.b32.xlu0 %v468, 113
    %v639 = vpop.permute.xlu0 %638
    %640 = vrot.lane.b32.xlu0 %v469, 113
    %v641 = vpop.permute.xlu0 %640
    %v642 = vsel %vm387, %v639, %v641
    %v643 = vsel %vm387, %v641, %v639
    %v644 = vmul.f32 %v642, %v166
    %v645 = vmul.f32 %v643, %v167
    %s646 = sld [smem:[#allocation2 + $0xf]]
    %v647 = vmax.f32 %v644, 0.0
    %v648 = vmax.f32 %v645, 0.0
    %v649 = vstv %s646
    %v650 = vmul.f32 %v649, %v647
    %v651 = vmul.f32 %v649, %v648
    %v652 = vadd.f32 %v630, %v650
    %v653 = vadd.f32 %v631, %v651
    %s654 = sld [smem:[#allocation4 + $0xf]]
    %v655 = vstv %s654
    %v656 = vmul.f32 %v655, %v644
    %v657 = vmul.f32 %v655, %v645
    %v658 = vadd.f32 %v636, %v656
    %v659 = vadd.f32 %v637, %v657
    %660 = vrot.lane.b32.xlu0 %v468, 112
    %v661 = vpop.permute.xlu0 %660
    %662 = vrot.lane.b32.xlu0 %v469, 112
    %v663 = vpop.permute.xlu0 %662
    %v664 = vsel %vm410, %v661, %v663
    %v665 = vsel %vm410, %v663, %v661
    %v666 = vmul.f32 %v664, %v174
    %v667 = vmul.f32 %v665, %v175
    %s668 = sld [smem:[#allocation2 + $0x10]]
    %v669 = vmax.f32 %v666, 0.0
    %v670 = vmax.f32 %v667, 0.0
    %v671 = vstv %s668
    %v672 = vmul.f32 %v671, %v669
    %v673 = vmul.f32 %v671, %v670
    %v674 = vadd.f32 %v652, %v672
    %v675 = vadd.f32 %v653, %v673
    %s676 = sld [smem:[#allocation4 + $0x10]]
    %v677 = vstv %s676
    %v678 = vmul.f32 %v677, %v666
    %v679 = vmul.f32 %v677, %v667
    %v680 = vadd.f32 %v658, %v678
    %v681 = vadd.f32 %v659, %v679
    %682 = vrot.lane.b32.xlu0 %v468, 111
    %v683 = vpop.permute.xlu0 %682
    %684 = vrot.lane.b32.xlu0 %v469, 111
    %v685 = vpop.permute.xlu0 %684
    %v686 = vsel %vm433, %v683, %v685
    %v687 = vsel %vm433, %v685, %v683
    %v688 = vmul.f32 %v686, %v182
    %v689 = vmul.f32 %v687, %v183
    %s690 = sld [smem:[#allocation2 + $0x11]]
    %v691 = vmax.f32 %v688, 0.0
    %v692 = vmax.f32 %v689, 0.0
    %v693 = vstv %s690
    %v694 = vmul.f32 %v693, %v691
    %v695 = vmul.f32 %v693, %v692
    %v696 = vadd.f32 %v674, %v694
    %v697 = vadd.f32 %v675, %v695
    %s698 = sld [smem:[#allocation4 + $0x11]]
    %v699 = vstv %s698
    %v700 = vmul.f32 %v699, %v688
    %v701 = vmul.f32 %v699, %v689
    %v702 = vadd.f32 %v680, %v700
    %v703 = vadd.f32 %v681, %v701
    %v704 = vlaneseq
    %v705 = vshrl.u32 %v704, 7
    %v706 = vsub.s32 2, %v705
    %v707 = vrot.slane %v71, %v706
    %v708 = vlaneseq
    %v709 = vshrl.u32 %v708, 7
    %v710 = vsub.s32 6, %v709
    %v711 = vrot.slane %v71, %v710
    %v712 = vlaneseq
    %v713 = vshrl.u32 %v712, 7
    %v714 = vsub.s32 2, %v713
    %v715 = vrot.slane %v72, %v714
    %v716 = vlaneseq
    %v717 = vshrl.u32 %v716, 7
    %v718 = vsub.s32 6, %v717
    %v719 = vrot.slane %v72, %v718
    %v720 = vsel %vm205, %v715, %v707
    %v721 = vsel %vm205, %v719, %v711
    %724 = vrot.lane.b32.xlu0 %v720, 17
    %v725 = vpop.permute.xlu0 %724
    %726 = vrot.lane.b32.xlu0 %v721, 17
    %v727 = vpop.permute.xlu0 %726
    %v728 = vsel %vm214, %v725, %v727
    %v729 = vsel %vm214, %v727, %v725
    %v730 = vmul.f32 %v729, %v102
    %v731 = vmul.f32 %v728, %v103
    %s732 = sld [smem:[#allocation2 + $0x12]]
    %v733 = vmax.f32 %v730, 0.0
    %v734 = vmax.f32 %v731, 0.0
    %v735 = vstv %s732
    %v736 = vmul.f32 %v735, %v733
    %v737 = vmul.f32 %v735, %v734
    %v738 = vadd.f32 %v696, %v736
    %v739 = vadd.f32 %v697, %v737
    %s740 = sld [smem:[#allocation4 + $0x12]]
    %v741 = vstv %s740
    %v742 = vmul.f32 %v741, %v730
    %v743 = vmul.f32 %v741, %v731
    %v744 = vadd.f32 %v702, %v742
    %v745 = vadd.f32 %v703, %v743
    %746 = vrot.lane.b32.xlu0 %v720, 16
    %v747 = vpop.permute.xlu0 %746
    %748 = vrot.lane.b32.xlu0 %v721, 16
    %v749 = vpop.permute.xlu0 %748
    %v750 = vsel %vm237, %v747, %v749
    %v751 = vsel %vm237, %v749, %v747
    %v752 = vmul.f32 %v751, %v114
    %v753 = vmul.f32 %v750, %v115
    %s754 = sld [smem:[#allocation2 + $0x13]]
    %v755 = vmax.f32 %v752, 0.0
    %v756 = vmax.f32 %v753, 0.0
    %v757 = vstv %s754
    %v758 = vmul.f32 %v757, %v755
    %v759 = vmul.f32 %v757, %v756
    %v760 = vadd.f32 %v738, %v758
    %v761 = vadd.f32 %v739, %v759
    %s762 = sld [smem:[#allocation4 + $0x13]]
    %v763 = vstv %s762
    %v764 = vmul.f32 %v763, %v752
    %v765 = vmul.f32 %v763, %v753
    %v766 = vadd.f32 %v744, %v764
    %v767 = vadd.f32 %v745, %v765
    %768 = vrot.lane.b32.xlu0 %v720, 15
    %v769 = vpop.permute.xlu0 %768
    %770 = vrot.lane.b32.xlu0 %v721, 15
    %v771 = vpop.permute.xlu0 %770
    %v772 = vsel %vm260, %v769, %v771
    %v773 = vsel %vm260, %v771, %v769
    %v774 = vmul.f32 %v773, %v128
    %v775 = vmul.f32 %v772, %v129
    %s776 = sld [smem:[#allocation2 + $0x14]]
    %v777 = vmax.f32 %v774, 0.0
    %v778 = vmax.f32 %v775, 0.0
    %v779 = vstv %s776
    %v780 = vmul.f32 %v779, %v777
    %v781 = vmul.f32 %v779, %v778
    %v782 = vadd.f32 %v760, %v780
    %v783 = vadd.f32 %v761, %v781
    %s784 = sld [smem:[#allocation4 + $0x14]]
    %v785 = vstv %s784
    %v786 = vmul.f32 %v785, %v774
    %v787 = vmul.f32 %v785, %v775
    %v788 = vadd.f32 %v766, %v786
    %v789 = vadd.f32 %v767, %v787
    %790 = vrot.lane.b32.xlu0 %v720, 1
    %v791 = vpop.permute.xlu0 %790
    %792 = vrot.lane.b32.xlu0 %v721, 1
    %v793 = vpop.permute.xlu0 %792
    %v794 = vsel %vm283, %v791, %v793
    %v795 = vsel %vm283, %v793, %v791
    %v796 = vmul.f32 %v795, %v142
    %v797 = vmul.f32 %v794, %v143
    %s798 = sld [smem:[#allocation2 + $0x15]]
    %v799 = vmax.f32 %v796, 0.0
    %v800 = vmax.f32 %v797, 0.0
    %v801 = vstv %s798
    %v802 = vmul.f32 %v801, %v799
    %v803 = vmul.f32 %v801, %v800
    %v804 = vadd.f32 %v782, %v802
    %v805 = vadd.f32 %v783, %v803
    %s806 = sld [smem:[#allocation4 + $0x15]]
    %v807 = vstv %s806
    %v808 = vmul.f32 %v807, %v796
    %v809 = vmul.f32 %v807, %v797
    %v810 = vadd.f32 %v788, %v808
    %v811 = vadd.f32 %v789, %v809
    %s812 = sld [smem:[#allocation2 + $0x16]]
    %v813 = vstv %s812
    %v814 = vmul.f32 %v813, %v303
    %v815 = vmul.f32 %v813, %v304
    %v818 = vlaneseq
    %v819 = vshrl.u32 %v818, 7
    %v820 = vsub.s32 2, %v819
    %v821 = vrot.slane %v814, %v820
    %v822 = vlaneseq
    %v823 = vshrl.u32 %v822, 7
    %v824 = vsub.s32 6, %v823
    %v825 = vrot.slane %v814, %v824
    %v826 = vlaneseq
    %v827 = vshrl.u32 %v826, 7
    %v828 = vsub.s32 2, %v827
    %v829 = vrot.slane %v815, %v828
    %v830 = vlaneseq
    %v831 = vshrl.u32 %v830, 7
    %v832 = vsub.s32 6, %v831
    %v833 = vrot.slane %v815, %v832
    %v834 = vsel %vm205, %v829, %v821
    %v835 = vsel %vm205, %v833, %v825
    %v838 = vadd.f32 %v804, %v834
    %v839 = vadd.f32 %v805, %v835
    %s840 = sld [smem:[#allocation4 + $0x16]]
    %v841 = vstv %s840
    %v842 = vmul.f32 %v841, %v71
    %v843 = vmul.f32 %v841, %v72
    %v846 = vlaneseq
    %v847 = vshrl.u32 %v846, 7
    %v848 = vsub.s32 2, %v847
    %v849 = vrot.slane %v842, %v848
    %v850 = vlaneseq
    %v851 = vshrl.u32 %v850, 7
    %v852 = vsub.s32 6, %v851
    %v853 = vrot.slane %v842, %v852
    %v854 = vlaneseq
    %v855 = vshrl.u32 %v854, 7
    %v856 = vsub.s32 2, %v855
    %v857 = vrot.slane %v843, %v856
    %v858 = vlaneseq
    %v859 = vshrl.u32 %v858, 7
    %v860 = vsub.s32 6, %v859
    %v861 = vrot.slane %v843, %v860
    %v862 = vsel %vm205, %v857, %v849
    %v863 = vsel %vm205, %v861, %v853
    %v866 = vadd.f32 %v810, %v862
    %v867 = vadd.f32 %v811, %v863
    %868 = vrot.lane.b32.xlu0 %v720, 127
    %v869 = vpop.permute.xlu0 %868
    %870 = vrot.lane.b32.xlu0 %v721, 127
    %v871 = vpop.permute.xlu0 %870
    %v872 = vsel %vm364, %v869, %v871
    %v873 = vsel %vm364, %v871, %v869
    %v874 = vmul.f32 %v872, %v150
    %v875 = vmul.f32 %v873, %v151
    %s876 = sld [smem:[#allocation2 + $0x17]]
    %v877 = vmax.f32 %v874, 0.0
    %v878 = vmax.f32 %v875, 0.0
    %v879 = vstv %s876
    %v880 = vmul.f32 %v879, %v877
    %v881 = vmul.f32 %v879, %v878
    %v882 = vadd.f32 %v838, %v880
    %v883 = vadd.f32 %v839, %v881
    %s884 = sld [smem:[#allocation4 + $0x17]]
    %v885 = vstv %s884
    %v886 = vmul.f32 %v885, %v874
    %v887 = vmul.f32 %v885, %v875
    %v888 = vadd.f32 %v866, %v886
    %v889 = vadd.f32 %v867, %v887
    %890 = vrot.lane.b32.xlu0 %v720, 113
    %v891 = vpop.permute.xlu0 %890
    %892 = vrot.lane.b32.xlu0 %v721, 113
    %v893 = vpop.permute.xlu0 %892
    %v894 = vsel %vm387, %v891, %v893
    %v895 = vsel %vm387, %v893, %v891
    %v896 = vmul.f32 %v894, %v166
    %v897 = vmul.f32 %v895, %v167
    %s898 = sld [smem:[#allocation2 + $0x18]]
    %v899 = vmax.f32 %v896, 0.0
    %v900 = vmax.f32 %v897, 0.0
    %v901 = vstv %s898
    %v902 = vmul.f32 %v901, %v899
    %v903 = vmul.f32 %v901, %v900
    %v904 = vadd.f32 %v882, %v902
    %v905 = vadd.f32 %v883, %v903
    %s906 = sld [smem:[#allocation4 + $0x18]]
    %v907 = vstv %s906
    %v908 = vmul.f32 %v907, %v896
    %v909 = vmul.f32 %v907, %v897
    %v910 = vadd.f32 %v888, %v908
    %v911 = vadd.f32 %v889, %v909
    %912 = vrot.lane.b32.xlu0 %v720, 112
    %v913 = vpop.permute.xlu0 %912
    %914 = vrot.lane.b32.xlu0 %v721, 112
    %v915 = vpop.permute.xlu0 %914
    %v916 = vsel %vm410, %v913, %v915
    %v917 = vsel %vm410, %v915, %v913
    %v918 = vmul.f32 %v916, %v174
    %v919 = vmul.f32 %v917, %v175
    %s920 = sld [smem:[#allocation2 + $0x19]]
    %v921 = vmax.f32 %v918, 0.0
    %v922 = vmax.f32 %v919, 0.0
    %v923 = vstv %s920
    %v924 = vmul.f32 %v923, %v921
    %v925 = vmul.f32 %v923, %v922
    %v926 = vadd.f32 %v904, %v924
    %v927 = vadd.f32 %v905, %v925
    %s928 = sld [smem:[#allocation4 + $0x19]]
    %v929 = vstv %s928
    %v930 = vmul.f32 %v929, %v918
    %v931 = vmul.f32 %v929, %v919
    %v932 = vadd.f32 %v910, %v930
    %v933 = vadd.f32 %v911, %v931
    %934 = vrot.lane.b32.xlu0 %v720, 111
    %v935 = vpop.permute.xlu0 %934
    %936 = vrot.lane.b32.xlu0 %v721, 111
    %v937 = vpop.permute.xlu0 %936
    %v938 = vsel %vm433, %v935, %v937
    %v939 = vsel %vm433, %v937, %v935
    %v940 = vmul.f32 %v938, %v182
    %v941 = vmul.f32 %v939, %v183
    %s942 = sld [smem:[#allocation2 + $0x1a]]
    %v943 = vmax.f32 %v940, 0.0
    %v944 = vmax.f32 %v941, 0.0
    %v945 = vstv %s942
    %v946 = vmul.f32 %v945, %v943
    %v947 = vmul.f32 %v945, %v944
    %v948 = vadd.f32 %v926, %v946
    %v949 = vadd.f32 %v927, %v947
    %s950 = sld [smem:[#allocation4 + $0x1a]]
    %v951 = vstv %s950
    %v952 = vmul.f32 %v951, %v940
    %v953 = vmul.f32 %v951, %v941
    %v954 = vadd.f32 %v932, %v952
    %v955 = vadd.f32 %v933, %v953
    %v956 = vlaneseq
    %v957 = vshrl.u32 %v956, 7
    %v958 = vsub.s32 3, %v957
    %v959 = vrot.slane %v71, %v958
    %v960 = vlaneseq
    %v961 = vshrl.u32 %v960, 7
    %v962 = vsub.s32 7, %v961
    %v963 = vrot.slane %v71, %v962
    %v964 = vlaneseq
    %v965 = vshrl.u32 %v964, 7
    %v966 = vsub.s32 3, %v965
    %v967 = vrot.slane %v72, %v966
    %v968 = vlaneseq
    %v969 = vshrl.u32 %v968, 7
    %v970 = vsub.s32 7, %v969
    %v971 = vrot.slane %v72, %v970
    %v972 = vsel %vm205, %v967, %v959
    %v973 = vsel %vm205, %v971, %v963
    %976 = vrot.lane.b32.xlu0 %v972, 17
    %v977 = vpop.permute.xlu0 %976
    %978 = vrot.lane.b32.xlu0 %v973, 17
    %v979 = vpop.permute.xlu0 %978
    %v980 = vsel %vm214, %v977, %v979
    %v981 = vsel %vm214, %v979, %v977
    %v982 = vmul.f32 %v981, %v102
    %v983 = vmul.f32 %v980, %v103
    %s984 = sld [smem:[#allocation2 + $0x1b]]
    %v985 = vmax.f32 %v982, 0.0
    %v986 = vmax.f32 %v983, 0.0
    %v987 = vstv %s984
    %v988 = vmul.f32 %v987, %v985
    %v989 = vmul.f32 %v987, %v986
    %v990 = vadd.f32 %v948, %v988
    %v991 = vadd.f32 %v949, %v989
    %s992 = sld [smem:[#allocation4 + $0x1b]]
    %v993 = vstv %s992
    %v994 = vmul.f32 %v993, %v982
    %v995 = vmul.f32 %v993, %v983
    %v996 = vadd.f32 %v954, %v994
    %v997 = vadd.f32 %v955, %v995
    %998 = vrot.lane.b32.xlu0 %v972, 16
    %v999 = vpop.permute.xlu0 %998
    %1000 = vrot.lane.b32.xlu0 %v973, 16
    %v1001 = vpop.permute.xlu0 %1000
    %v1002 = vsel %vm237, %v999, %v1001
    %v1003 = vsel %vm237, %v1001, %v999
    %v1004 = vmul.f32 %v1003, %v114
    %v1005 = vmul.f32 %v1002, %v115
    %s1006 = sld [smem:[#allocation2 + $0x1c]]
    %v1007 = vmax.f32 %v1004, 0.0
    %v1008 = vmax.f32 %v1005, 0.0
    %v1009 = vstv %s1006
    %v1010 = vmul.f32 %v1009, %v1007
    %v1011 = vmul.f32 %v1009, %v1008
    %v1012 = vadd.f32 %v990, %v1010
    %v1013 = vadd.f32 %v991, %v1011
    %s1014 = sld [smem:[#allocation4 + $0x1c]]
    %v1015 = vstv %s1014
    %v1016 = vmul.f32 %v1015, %v1004
    %v1017 = vmul.f32 %v1015, %v1005
    %v1018 = vadd.f32 %v996, %v1016
    %v1019 = vadd.f32 %v997, %v1017
    %1020 = vrot.lane.b32.xlu0 %v972, 15
    %v1021 = vpop.permute.xlu0 %1020
    %1022 = vrot.lane.b32.xlu0 %v973, 15
    %v1023 = vpop.permute.xlu0 %1022
    %v1024 = vsel %vm260, %v1021, %v1023
    %v1025 = vsel %vm260, %v1023, %v1021
    %v1026 = vmul.f32 %v1025, %v128
    %v1027 = vmul.f32 %v1024, %v129
    %s1028 = sld [smem:[#allocation2 + $0x1d]]
    %v1029 = vmax.f32 %v1026, 0.0
    %v1030 = vmax.f32 %v1027, 0.0
    %v1031 = vstv %s1028
    %v1032 = vmul.f32 %v1031, %v1029
    %v1033 = vmul.f32 %v1031, %v1030
    %v1034 = vadd.f32 %v1012, %v1032
    %v1035 = vadd.f32 %v1013, %v1033
    %s1036 = sld [smem:[#allocation4 + $0x1d]]
    %v1037 = vstv %s1036
    %v1038 = vmul.f32 %v1037, %v1026
    %v1039 = vmul.f32 %v1037, %v1027
    %v1040 = vadd.f32 %v1018, %v1038
    %v1041 = vadd.f32 %v1019, %v1039
    %1042 = vrot.lane.b32.xlu0 %v972, 1
    %v1043 = vpop.permute.xlu0 %1042
    %1044 = vrot.lane.b32.xlu0 %v973, 1
    %v1045 = vpop.permute.xlu0 %1044
    %v1046 = vsel %vm283, %v1043, %v1045
    %v1047 = vsel %vm283, %v1045, %v1043
    %v1048 = vmul.f32 %v1047, %v142
    %v1049 = vmul.f32 %v1046, %v143
    %s1050 = sld [smem:[#allocation2 + $0x1e]]
    %v1051 = vmax.f32 %v1048, 0.0
    %v1052 = vmax.f32 %v1049, 0.0
    %v1053 = vstv %s1050
    %v1054 = vmul.f32 %v1053, %v1051
    %v1055 = vmul.f32 %v1053, %v1052
    %v1056 = vadd.f32 %v1034, %v1054
    %v1057 = vadd.f32 %v1035, %v1055
    %s1058 = sld [smem:[#allocation4 + $0x1e]]
    %v1059 = vstv %s1058
    %v1060 = vmul.f32 %v1059, %v1048
    %v1061 = vmul.f32 %v1059, %v1049
    %v1062 = vadd.f32 %v1040, %v1060
    %v1063 = vadd.f32 %v1041, %v1061
    %s1064 = sld [smem:[#allocation2 + $0x1f]]
    %v1065 = vstv %s1064
    %v1066 = vmul.f32 %v1065, %v303
    %v1067 = vmul.f32 %v1065, %v304
    %v1070 = vlaneseq
    %v1071 = vshrl.u32 %v1070, 7
    %v1072 = vsub.s32 3, %v1071
    %v1073 = vrot.slane %v1066, %v1072
    %v1074 = vlaneseq
    %v1075 = vshrl.u32 %v1074, 7
    %v1076 = vsub.s32 7, %v1075
    %v1077 = vrot.slane %v1066, %v1076
    %v1078 = vlaneseq
    %v1079 = vshrl.u32 %v1078, 7
    %v1080 = vsub.s32 3, %v1079
    %v1081 = vrot.slane %v1067, %v1080
    %v1082 = vlaneseq
    %v1083 = vshrl.u32 %v1082, 7
    %v1084 = vsub.s32 7, %v1083
    %v1085 = vrot.slane %v1067, %v1084
    %v1086 = vsel %vm205, %v1081, %v1073
    %v1087 = vsel %vm205, %v1085, %v1077
    %v1090 = vadd.f32 %v1056, %v1086
    %v1091 = vadd.f32 %v1057, %v1087
    %s1092 = sld [smem:[#allocation4 + $0x1f]]
    %v1093 = vstv %s1092
    %v1094 = vmul.f32 %v1093, %v71
    %v1095 = vmul.f32 %v1093, %v72
    %v1098 = vlaneseq
    %v1099 = vshrl.u32 %v1098, 7
    %v1100 = vsub.s32 3, %v1099
    %v1101 = vrot.slane %v1094, %v1100
    %v1102 = vlaneseq
    %v1103 = vshrl.u32 %v1102, 7
    %v1104 = vsub.s32 7, %v1103
    %v1105 = vrot.slane %v1094, %v1104
    %v1106 = vlaneseq
    %v1107 = vshrl.u32 %v1106, 7
    %v1108 = vsub.s32 3, %v1107
    %v1109 = vrot.slane %v1095, %v1108
    %v1110 = vlaneseq
    %v1111 = vshrl.u32 %v1110, 7
    %v1112 = vsub.s32 7, %v1111
    %v1113 = vrot.slane %v1095, %v1112
    %v1114 = vsel %vm205, %v1109, %v1101
    %v1115 = vsel %vm205, %v1113, %v1105
    %v1118 = vadd.f32 %v1062, %v1114
    %v1119 = vadd.f32 %v1063, %v1115
    %1120 = vrot.lane.b32.xlu0 %v972, 127
    %v1121 = vpop.permute.xlu0 %1120
    %1122 = vrot.lane.b32.xlu0 %v973, 127
    %v1123 = vpop.permute.xlu0 %1122
    %v1124 = vsel %vm364, %v1121, %v1123
    %v1125 = vsel %vm364, %v1123, %v1121
    %v1126 = vmul.f32 %v1124, %v150
    %v1127 = vmul.f32 %v1125, %v151
    %s1128 = sld [smem:[#allocation2 + $0x20]]
    %v1129 = vmax.f32 %v1126, 0.0
    %v1130 = vmax.f32 %v1127, 0.0
    %v1131 = vstv %s1128
    %v1132 = vmul.f32 %v1131, %v1129
    %v1133 = vmul.f32 %v1131, %v1130
    %v1134 = vadd.f32 %v1090, %v1132
    %v1135 = vadd.f32 %v1091, %v1133
    %s1136 = sld [smem:[#allocation4 + $0x20]]
    %v1137 = vstv %s1136
    %v1138 = vmul.f32 %v1137, %v1126
    %v1139 = vmul.f32 %v1137, %v1127
    %v1140 = vadd.f32 %v1118, %v1138
    %v1141 = vadd.f32 %v1119, %v1139
    %1142 = vrot.lane.b32.xlu0 %v972, 113
    %v1143 = vpop.permute.xlu0 %1142
    %1144 = vrot.lane.b32.xlu0 %v973, 113
    %v1145 = vpop.permute.xlu0 %1144
    %v1146 = vsel %vm387, %v1143, %v1145
    %v1147 = vsel %vm387, %v1145, %v1143
    %v1148 = vmul.f32 %v1146, %v166
    %v1149 = vmul.f32 %v1147, %v167
    %s1150 = sld [smem:[#allocation2 + $0x21]]
    %v1151 = vmax.f32 %v1148, 0.0
    %v1152 = vmax.f32 %v1149, 0.0
    %v1153 = vstv %s1150
    %v1154 = vmul.f32 %v1153, %v1151
    %v1155 = vmul.f32 %v1153, %v1152
    %v1156 = vadd.f32 %v1134, %v1154
    %v1157 = vadd.f32 %v1135, %v1155
    %s1158 = sld [smem:[#allocation4 + $0x21]]
    %v1159 = vstv %s1158
    %v1160 = vmul.f32 %v1159, %v1148
    %v1161 = vmul.f32 %v1159, %v1149
    %v1162 = vadd.f32 %v1140, %v1160
    %v1163 = vadd.f32 %v1141, %v1161
    %1164 = vrot.lane.b32.xlu0 %v972, 112
    %v1165 = vpop.permute.xlu0 %1164
    %1166 = vrot.lane.b32.xlu0 %v973, 112
    %v1167 = vpop.permute.xlu0 %1166
    %v1168 = vsel %vm410, %v1165, %v1167
    %v1169 = vsel %vm410, %v1167, %v1165
    %v1170 = vmul.f32 %v1168, %v174
    %v1171 = vmul.f32 %v1169, %v175
    %s1172 = sld [smem:[#allocation2 + $0x22]]
    %v1173 = vmax.f32 %v1170, 0.0
    %v1174 = vmax.f32 %v1171, 0.0
    %v1175 = vstv %s1172
    %v1176 = vmul.f32 %v1175, %v1173
    %v1177 = vmul.f32 %v1175, %v1174
    %v1178 = vadd.f32 %v1156, %v1176
    %v1179 = vadd.f32 %v1157, %v1177
    %s1180 = sld [smem:[#allocation4 + $0x22]]
    %v1181 = vstv %s1180
    %v1182 = vmul.f32 %v1181, %v1170
    %v1183 = vmul.f32 %v1181, %v1171
    %v1184 = vadd.f32 %v1162, %v1182
    %v1185 = vadd.f32 %v1163, %v1183
    %1186 = vrot.lane.b32.xlu0 %v972, 111
    %v1187 = vpop.permute.xlu0 %1186
    %1188 = vrot.lane.b32.xlu0 %v973, 111
    %v1189 = vpop.permute.xlu0 %1188
    %v1190 = vsel %vm433, %v1187, %v1189
    %v1191 = vsel %vm433, %v1189, %v1187
    %v1192 = vmul.f32 %v1190, %v182
    %v1193 = vmul.f32 %v1191, %v183
    %s1194 = sld [smem:[#allocation2 + $0x23]]
    %v1195 = vmax.f32 %v1192, 0.0
    %v1196 = vmax.f32 %v1193, 0.0
    %v1197 = vstv %s1194
    %v1198 = vmul.f32 %v1197, %v1195
    %v1199 = vmul.f32 %v1197, %v1196
    %v1200 = vadd.f32 %v1178, %v1198
    %v1201 = vadd.f32 %v1179, %v1199
    %s1202 = sld [smem:[#allocation4 + $0x23]]
    %v1203 = vstv %s1202
    %v1204 = vmul.f32 %v1203, %v1192
    %v1205 = vmul.f32 %v1203, %v1193
    %v1206 = vadd.f32 %v1184, %v1204
    %v1207 = vadd.f32 %v1185, %v1205
    %v1210 = vcombine.low %v73, %v74
    %v1212 = vunpack.c.l.s4 1966171168
    %v1213 = vunpack.c.0.s8 %v1212
    %v1214 = vlaneseq
    %v1215 = vshrl.u32 %v1214, 7
    %v1216 = vsub.s32 %v1213, %v1215
    %v1217 = vrot.slane %v1210, %v1216
    %v1218 = vcombine.high %v1217, %v1217
    %v1220 = vunpack.c.l.s4 1966171168
    %v1221 = vunpack.c.0.s8 %v1220
    %v1222 = vlaneseq
    %v1223 = vshrl.u32 %v1222, 7
    %v1224 = vsub.s32 %v1221, %v1223
    %v1225 = vrot.slane %v1217, %v1224
    %v1227 = vunpack.c.l.s4 1966171168
    %v1228 = vunpack.c.0.s8 %v1227
    %v1229 = vlaneseq
    %v1230 = vshrl.u32 %v1229, 7
    %v1231 = vsub.s32 %v1228, %v1230
    %v1232 = vrot.slane %v1218, %v1231
    %1235 = vrot.lane.b32.xlu0 %v1225, 17
    %v1236 = vpop.permute.xlu0 %1235
    %1237 = vrot.lane.b32.xlu0 %v1232, 17
    %v1238 = vpop.permute.xlu0 %1237
    %v1239 = vsel %vm214, %v1236, %v1238
    %v1240 = vsel %vm214, %v1238, %v1236
    %v1241 = vmul.f32 %v1240, %v102
    %v1242 = vmul.f32 %v1239, %v103
    %s1243 = sld [smem:[#allocation2 + $0x24]]
    %v1244 = vmax.f32 %v1241, 0.0
    %v1245 = vmax.f32 %v1242, 0.0
    %v1246 = vstv %s1243
    %v1247 = vmul.f32 %v1246, %v1244
    %v1248 = vmul.f32 %v1246, %v1245
    %v1249 = vadd.f32 %v1200, %v1247
    %v1250 = vadd.f32 %v1201, %v1248
    %s1251 = sld [smem:[#allocation4 + $0x24]]
    %v1252 = vstv %s1251
    %v1253 = vmul.f32 %v1252, %v1241
    %v1254 = vmul.f32 %v1252, %v1242
    %v1255 = vadd.f32 %v1206, %v1253
    %v1256 = vadd.f32 %v1207, %v1254
    %1257 = vrot.lane.b32.xlu0 %v1225, 16
    %v1258 = vpop.permute.xlu0 %1257
    %1259 = vrot.lane.b32.xlu0 %v1232, 16
    %v1260 = vpop.permute.xlu0 %1259
    %v1261 = vsel %vm237, %v1258, %v1260
    %v1262 = vsel %vm237, %v1260, %v1258
    %v1263 = vmul.f32 %v1262, %v114
    %v1264 = vmul.f32 %v1261, %v115
    %s1265 = sld [smem:[#allocation2 + $0x25]]
    %v1266 = vmax.f32 %v1263, 0.0
    %v1267 = vmax.f32 %v1264, 0.0
    %v1268 = vstv %s1265
    %v1269 = vmul.f32 %v1268, %v1266
    %v1270 = vmul.f32 %v1268, %v1267
    %v1271 = vadd.f32 %v1249, %v1269
    %v1272 = vadd.f32 %v1250, %v1270
    %s1273 = sld [smem:[#allocation4 + $0x25]]
    %v1274 = vstv %s1273
    %v1275 = vmul.f32 %v1274, %v1263
    %v1276 = vmul.f32 %v1274, %v1264
    %v1277 = vadd.f32 %v1255, %v1275
    %v1278 = vadd.f32 %v1256, %v1276
    %1279 = vrot.lane.b32.xlu0 %v1225, 15
    %v1280 = vpop.permute.xlu0 %1279
    %1281 = vrot.lane.b32.xlu0 %v1232, 15
    %v1282 = vpop.permute.xlu0 %1281
    %v1283 = vsel %vm260, %v1280, %v1282
    %v1284 = vsel %vm260, %v1282, %v1280
    %v1285 = vmul.f32 %v1284, %v128
    %v1286 = vmul.f32 %v1283, %v129
    %s1287 = sld [smem:[#allocation2 + $0x26]]
    %v1288 = vmax.f32 %v1285, 0.0
    %v1289 = vmax.f32 %v1286, 0.0
    %v1290 = vstv %s1287
    %v1291 = vmul.f32 %v1290, %v1288
    %v1292 = vmul.f32 %v1290, %v1289
    %v1293 = vadd.f32 %v1271, %v1291
    %v1294 = vadd.f32 %v1272, %v1292
    %s1295 = sld [smem:[#allocation4 + $0x26]]
    %v1296 = vstv %s1295
    %v1297 = vmul.f32 %v1296, %v1285
    %v1298 = vmul.f32 %v1296, %v1286
    %v1299 = vadd.f32 %v1277, %v1297
    %v1300 = vadd.f32 %v1278, %v1298
    %1301 = vrot.lane.b32.xlu0 %v1225, 1
    %v1302 = vpop.permute.xlu0 %1301
    %1303 = vrot.lane.b32.xlu0 %v1232, 1
    %v1304 = vpop.permute.xlu0 %1303
    %v1305 = vsel %vm283, %v1302, %v1304
    %v1306 = vsel %vm283, %v1304, %v1302
    %v1307 = vmul.f32 %v1306, %v142
    %v1308 = vmul.f32 %v1305, %v143
    %s1309 = sld [smem:[#allocation2 + $0x27]]
    %v1310 = vmax.f32 %v1307, 0.0
    %v1311 = vmax.f32 %v1308, 0.0
    %v1312 = vstv %s1309
    %v1313 = vmul.f32 %v1312, %v1310
    %v1314 = vmul.f32 %v1312, %v1311
    %v1315 = vadd.f32 %v1293, %v1313
    %v1316 = vadd.f32 %v1294, %v1314
    %s1317 = sld [smem:[#allocation4 + $0x27]]
    %v1318 = vstv %s1317
    %v1319 = vmul.f32 %v1318, %v1307
    %v1320 = vmul.f32 %v1318, %v1308
    %v1321 = vadd.f32 %v1299, %v1319
    %v1322 = vadd.f32 %v1300, %v1320
    %s1323 = sld [smem:[#allocation2 + $0x28]]
    %v1324 = vmax.f32 %v73, 0.0
    %v1325 = vmax.f32 %v74, 0.0
    %v1326 = vstv %s1323
    %v1327 = vmul.f32 %v1326, %v1324
    %v1328 = vmul.f32 %v1326, %v1325
    %v1331 = vcombine.low %v1327, %v1328
    %v1333 = vunpack.c.l.s4 1966171168
    %v1334 = vunpack.c.0.s8 %v1333
    %v1335 = vlaneseq
    %v1336 = vshrl.u32 %v1335, 7
    %v1337 = vsub.s32 %v1334, %v1336
    %v1338 = vrot.slane %v1331, %v1337
    %v1339 = vcombine.high %v1338, %v1338
    %v1341 = vunpack.c.l.s4 1966171168
    %v1342 = vunpack.c.0.s8 %v1341
    %v1343 = vlaneseq
    %v1344 = vshrl.u32 %v1343, 7
    %v1345 = vsub.s32 %v1342, %v1344
    %v1346 = vrot.slane %v1338, %v1345
    %v1348 = vunpack.c.l.s4 1966171168
    %v1349 = vunpack.c.0.s8 %v1348
    %v1350 = vlaneseq
    %v1351 = vshrl.u32 %v1350, 7
    %v1352 = vsub.s32 %v1349, %v1351
    %v1353 = vrot.slane %v1339, %v1352
    %v1356 = vadd.f32 %v1315, %v1346
    %v1357 = vadd.f32 %v1316, %v1353
    %s1358 = sld [smem:[#allocation4 + $0x28]]
    %v1359 = vstv %s1358
    %v1360 = vmul.f32 %v1359, %v73
    %v1361 = vmul.f32 %v1359, %v74
    %v1364 = vcombine.low %v1360, %v1361
    %v1366 = vunpack.c.l.s4 1966171168
    %v1367 = vunpack.c.0.s8 %v1366
    %v1368 = vlaneseq
    %v1369 = vshrl.u32 %v1368, 7
    %v1370 = vsub.s32 %v1367, %v1369
    %v1371 = vrot.slane %v1364, %v1370
    %v1372 = vcombine.high %v1371, %v1371
    %v1374 = vunpack.c.l.s4 1966171168
    %v1375 = vunpack.c.0.s8 %v1374
    %v1376 = vlaneseq
    %v1377 = vshrl.u32 %v1376, 7
    %v1378 = vsub.s32 %v1375, %v1377
    %v1379 = vrot.slane %v1371, %v1378
    %v1381 = vunpack.c.l.s4 1966171168
    %v1382 = vunpack.c.0.s8 %v1381
    %v1383 = vlaneseq
    %v1384 = vshrl.u32 %v1383, 7
    %v1385 = vsub.s32 %v1382, %v1384
    %v1386 = vrot.slane %v1372, %v1385
    %v1389 = vadd.f32 %v1321, %v1379
    %v1390 = vadd.f32 %v1322, %v1386
    %1391 = vrot.lane.b32.xlu0 %v1225, 127
    %v1392 = vpop.permute.xlu0 %1391
    %1393 = vrot.lane.b32.xlu0 %v1232, 127
    %v1394 = vpop.permute.xlu0 %1393
    %v1395 = vsel %vm364, %v1392, %v1394
    %v1396 = vsel %vm364, %v1394, %v1392
    %v1397 = vmul.f32 %v1395, %v150
    %v1398 = vmul.f32 %v1396, %v151
    %s1399 = sld [smem:[#allocation2 + $0x29]]
    %v1400 = vmax.f32 %v1397, 0.0
    %v1401 = vmax.f32 %v1398, 0.0
    %v1402 = vstv %s1399
    %v1403 = vmul.f32 %v1402, %v1400
    %v1404 = vmul.f32 %v1402, %v1401
    %v1405 = vadd.f32 %v1356, %v1403
    %v1406 = vadd.f32 %v1357, %v1404
    %s1407 = sld [smem:[#allocation4 + $0x29]]
    %v1408 = vstv %s1407
    %v1409 = vmul.f32 %v1408, %v1397
    %v1410 = vmul.f32 %v1408, %v1398
    %v1411 = vadd.f32 %v1389, %v1409
    %v1412 = vadd.f32 %v1390, %v1410
    %1413 = vrot.lane.b32.xlu0 %v1225, 113
    %v1414 = vpop.permute.xlu0 %1413
    %1415 = vrot.lane.b32.xlu0 %v1232, 113
    %v1416 = vpop.permute.xlu0 %1415
    %v1417 = vsel %vm387, %v1414, %v1416
    %v1418 = vsel %vm387, %v1416, %v1414
    %v1419 = vmul.f32 %v1417, %v166
    %v1420 = vmul.f32 %v1418, %v167
    %s1421 = sld [smem:[#allocation2 + $0x2a]]
    %v1422 = vmax.f32 %v1419, 0.0
    %v1423 = vmax.f32 %v1420, 0.0
    %v1424 = vstv %s1421
    %v1425 = vmul.f32 %v1424, %v1422
    %v1426 = vmul.f32 %v1424, %v1423
    %v1427 = vadd.f32 %v1405, %v1425
    %v1428 = vadd.f32 %v1406, %v1426
    %s1429 = sld [smem:[#allocation4 + $0x2a]]
    %v1430 = vstv %s1429
    %v1431 = vmul.f32 %v1430, %v1419
    %v1432 = vmul.f32 %v1430, %v1420
    %v1433 = vadd.f32 %v1411, %v1431
    %v1434 = vadd.f32 %v1412, %v1432
    %1435 = vrot.lane.b32.xlu0 %v1225, 112
    %v1436 = vpop.permute.xlu0 %1435
    %1437 = vrot.lane.b32.xlu0 %v1232, 112
    %v1438 = vpop.permute.xlu0 %1437
    %v1439 = vsel %vm410, %v1436, %v1438
    %v1440 = vsel %vm410, %v1438, %v1436
    %v1441 = vmul.f32 %v1439, %v174
    %v1442 = vmul.f32 %v1440, %v175
    %s1443 = sld [smem:[#allocation2 + $0x2b]]
    %v1444 = vmax.f32 %v1441, 0.0
    %v1445 = vmax.f32 %v1442, 0.0
    %v1446 = vstv %s1443
    %v1447 = vmul.f32 %v1446, %v1444
    %v1448 = vmul.f32 %v1446, %v1445
    %v1449 = vadd.f32 %v1427, %v1447
    %v1450 = vadd.f32 %v1428, %v1448
    %s1451 = sld [smem:[#allocation4 + $0x2b]]
    %v1452 = vstv %s1451
    %v1453 = vmul.f32 %v1452, %v1441
    %v1454 = vmul.f32 %v1452, %v1442
    %v1455 = vadd.f32 %v1433, %v1453
    %v1456 = vadd.f32 %v1434, %v1454
    %1457 = vrot.lane.b32.xlu0 %v1225, 111
    %v1458 = vpop.permute.xlu0 %1457
    %1459 = vrot.lane.b32.xlu0 %v1232, 111
    %v1460 = vpop.permute.xlu0 %1459
    %v1461 = vsel %vm433, %v1458, %v1460
    %v1462 = vsel %vm433, %v1460, %v1458
    %v1463 = vmul.f32 %v1461, %v182
    %v1464 = vmul.f32 %v1462, %v183
    %s1465 = sld [smem:[#allocation2 + $0x2c]]
    %v1466 = vmax.f32 %v1463, 0.0
    %v1467 = vmax.f32 %v1464, 0.0
    %v1468 = vstv %s1465
    %v1469 = vmul.f32 %v1468, %v1466
    %v1470 = vmul.f32 %v1468, %v1467
    %v1471 = vadd.f32 %v1449, %v1469
    %v1472 = vadd.f32 %v1450, %v1470
    %s1473 = sld [smem:[#allocation4 + $0x2c]]
    %v1474 = vstv %s1473
    %v1475 = vmul.f32 %v1474, %v1463
    %v1476 = vmul.f32 %v1474, %v1464
    %v1477 = vadd.f32 %v1455, %v1475
    %v1478 = vadd.f32 %v1456, %v1476
    %v1479 = vstv %s184
    %v1480 = vadd.f32 %v1471, %v1479
    %v1481 = vadd.f32 %v1472, %v1479
    %v1482 = vmax.f32 %v1480, 0.0
    %v1483 = vmax.f32 %v1481, 0.0
    %1484 = vrot.lane.b32.xlu0 %v1482, 17
    %v1485 = vpop.permute.xlu0 %1484
    %1486 = vrot.lane.b32.xlu0 %v1483, 17
    %v1487 = vpop.permute.xlu0 %1486
    %v1488 = vsel %vm214, %v1485, %v1487
    %v1489 = vsel %vm214, %v1487, %v1485
    %v1490 = vmul.f32 %v1489, %v102
    %v1491 = vmul.f32 %v1488, %v103
    %s1492 = sld [smem:[#allocation6]]
    %v1493 = vstv %s1492
    %v1494 = vmul.f32 %v1493, %v1490
    %v1495 = vmul.f32 %v1493, %v1491
    %v1496 = vadd.f32 %v1494, 0.0
    %v1497 = vadd.f32 %v1495, 0.0
    %1498 = vrot.lane.b32.xlu0 %v1482, 16
    %v1499 = vpop.permute.xlu0 %1498
    %1500 = vrot.lane.b32.xlu0 %v1483, 16
    %v1501 = vpop.permute.xlu0 %1500
    %v1502 = vsel %vm237, %v1499, %v1501
    %v1503 = vsel %vm237, %v1501, %v1499
    %v1504 = vmul.f32 %v1503, %v114
    %v1505 = vmul.f32 %v1502, %v115
    %s1506 = sld [smem:[#allocation6 + $0x1]]
    %v1507 = vstv %s1506
    %v1508 = vmul.f32 %v1507, %v1504
    %v1509 = vmul.f32 %v1507, %v1505
    %v1510 = vadd.f32 %v1496, %v1508
    %v1511 = vadd.f32 %v1497, %v1509
    %1512 = vrot.lane.b32.xlu0 %v1482, 15
    %v1513 = vpop.permute.xlu0 %1512
    %1514 = vrot.lane.b32.xlu0 %v1483, 15
    %v1515 = vpop.permute.xlu0 %1514
    %v1516 = vsel %vm260, %v1513, %v1515
    %v1517 = vsel %vm260, %v1515, %v1513
    %v1518 = vmul.f32 %v1517, %v128
    %v1519 = vmul.f32 %v1516, %v129
    %s1520 = sld [smem:[#allocation6 + $0x2]]
    %v1521 = vstv %s1520
    %v1522 = vmul.f32 %v1521, %v1518
    %v1523 = vmul.f32 %v1521, %v1519
    %v1524 = vadd.f32 %v1510, %v1522
    %v1525 = vadd.f32 %v1511, %v1523
    %1526 = vrot.lane.b32.xlu0 %v1482, 1
    %v1527 = vpop.permute.xlu0 %1526
    %1528 = vrot.lane.b32.xlu0 %v1483, 1
    %v1529 = vpop.permute.xlu0 %1528
    %v1530 = vsel %vm283, %v1527, %v1529
    %v1531 = vsel %vm283, %v1529, %v1527
    %v1532 = vmul.f32 %v1531, %v142
    %v1533 = vmul.f32 %v1530, %v143
    %s1534 = sld [smem:[#allocation6 + $0x3]]
    %v1535 = vstv %s1534
    %v1536 = vmul.f32 %v1535, %v1532
    %v1537 = vmul.f32 %v1535, %v1533
    %v1538 = vadd.f32 %v1524, %v1536
    %v1539 = vadd.f32 %v1525, %v1537
    %s1540 = sld [smem:[#allocation6 + $0x4]]
    %v1541 = vstv %s1540
    %v1542 = vmul.f32 %v1541, %v1482
    %v1543 = vmul.f32 %v1541, %v1483
    %v1544 = vadd.f32 %v1538, %v1542
    %v1545 = vadd.f32 %v1539, %v1543
    %1546 = vrot.lane.b32.xlu0 %v1482, 127
    %v1547 = vpop.permute.xlu0 %1546
    %1548 = vrot.lane.b32.xlu0 %v1483, 127
    %v1549 = vpop.permute.xlu0 %1548
    %v1550 = vsel %vm364, %v1547, %v1549
    %v1551 = vsel %vm364, %v1549, %v1547
    %v1552 = vmul.f32 %v1550, %v150
    %v1553 = vmul.f32 %v1551, %v151
    %s1554 = sld [smem:[#allocation6 + $0x5]]
    %v1555 = vstv %s1554
    %v1556 = vmul.f32 %v1555, %v1552
    %v1557 = vmul.f32 %v1555, %v1553
    %v1558 = vadd.f32 %v1544, %v1556
    %v1559 = vadd.f32 %v1545, %v1557
    %1560 = vrot.lane.b32.xlu0 %v1482, 113
    %v1561 = vpop.permute.xlu0 %1560
    %1562 = vrot.lane.b32.xlu0 %v1483, 113
    %v1563 = vpop.permute.xlu0 %1562
    %v1564 = vsel %vm387, %v1561, %v1563
    %v1565 = vsel %vm387, %v1563, %v1561
    %v1566 = vmul.f32 %v1564, %v166
    %v1567 = vmul.f32 %v1565, %v167
    %s1568 = sld [smem:[#allocation6 + $0x6]]
    %v1569 = vstv %s1568
    %v1570 = vmul.f32 %v1569, %v1566
    %v1571 = vmul.f32 %v1569, %v1567
    %v1572 = vadd.f32 %v1558, %v1570
    %v1573 = vadd.f32 %v1559, %v1571
    %1574 = vrot.lane.b32.xlu0 %v1482, 112
    %v1575 = vpop.permute.xlu0 %1574
    %1576 = vrot.lane.b32.xlu0 %v1483, 112
    %v1577 = vpop.permute.xlu0 %1576
    %v1578 = vsel %vm410, %v1575, %v1577
    %v1579 = vsel %vm410, %v1577, %v1575
    %v1580 = vmul.f32 %v1578, %v174
    %v1581 = vmul.f32 %v1579, %v175
    %s1582 = sld [smem:[#allocation6 + $0x7]]
    %v1583 = vstv %s1582
    %v1584 = vmul.f32 %v1583, %v1580
    %v1585 = vmul.f32 %v1583, %v1581
    %v1586 = vadd.f32 %v1572, %v1584
    %v1587 = vadd.f32 %v1573, %v1585
    %1588 = vrot.lane.b32.xlu0 %v1482, 111
    %v1589 = vpop.permute.xlu0 %1588
    %1590 = vrot.lane.b32.xlu0 %v1483, 111
    %v1591 = vpop.permute.xlu0 %1590
    %v1592 = vsel %vm433, %v1589, %v1591
    %v1593 = vsel %vm433, %v1591, %v1589
    %v1594 = vmul.f32 %v1592, %v182
    %v1595 = vmul.f32 %v1593, %v183
    %s1596 = sld [smem:[#allocation6 + $0x8]]
    %v1597 = vstv %s1596
    %v1598 = vmul.f32 %v1597, %v1594
    %v1599 = vmul.f32 %v1597, %v1595
    %v1600 = vadd.f32 %v1586, %v1598
    %v1601 = vadd.f32 %v1587, %v1599
    %v1602 = vstv %s186
    %v1603 = vadd.f32 %v1477, %v1602
    %v1604 = vadd.f32 %v1478, %v1602
    %v1605 = vstv %s185
    %v1606 = vadd.f32 %v1600, %v1605
    %v1607 = vadd.f32 %v1601, %v1605
    %v1608 = vadd.f32 %v1603, %v1606
    %v1609 = vadd.f32 %v1604, %v1607
    %v1610 = vxor.u32 %v1608, 2147483648
    %v1611 = vxor.u32 %v1609, 2147483648
    %v1612 = vmul.f32 %v1610, 1.442695
    %v1613 = vpow.pop %v1612
    %v1614 = vmul.f32 %v1611, 1.442695
    %v1615 = vpow.pop %v1614
    %v1616 = vadd.f32 %v1613, 1.0
    %v1617 = vadd.f32 %v1615, 1.0
    %v1618 = vrcp.pop %v1616
    %v1619 = vmul.f32 1.0, %v1618
    %v1620 = vrcp.pop %v1617
    %v1621 = vmul.f32 1.0, %v1620
    %v1624 = vcombine.low %v1619, %v1621
    %v1626 = vunpack.c.l.s4 1966171168
    %v1627 = vunpack.c.0.s8 %v1626
    %v1628 = vlaneseq
    %v1629 = vshrl.u32 %v1628, 7
    %v1630 = vsub.s32 %v1627, %v1629
    %v1631 = vrot.slane %v1624, %v1630
    %v1632 = vcombine.high %v1631, %v1631
    %v1634 = vunpack.c.l.s4 1966171168
    %v1635 = vunpack.c.0.s8 %v1634
    %v1636 = vlaneseq
    %v1637 = vshrl.u32 %v1636, 7
    %v1638 = vsub.s32 %v1635, %v1637
    %v1639 = vrot.slane %v1631, %v1638
    %v1641 = vunpack.c.l.s4 1966171168
    %v1642 = vunpack.c.0.s8 %v1641
    %v1643 = vlaneseq
    %v1644 = vshrl.u32 %v1643, 7
    %v1645 = vsub.s32 %v1642, %v1644
    %v1646 = vrot.slane %v1632, %v1645
    %v1647 = vlaneseq
    %v1648 = vshrl.u32 %v1647, 7
    %v1649 = vsub.s32 0, %v1648
    %v1650 = vrot.slane %v1639, %v1649
    %v1651 = vlaneseq
    %v1652 = vshrl.u32 %v1651, 7
    %v1653 = vsub.s32 1, %v1652
    %v1654 = vrot.slane %v1639, %v1653
    %v1655 = vlaneseq
    %v1656 = vshrl.u32 %v1655, 7
    %v1657 = vsub.s32 0, %v1656
    %v1658 = vrot.slane %v1646, %v1657
    %v1659 = vlaneseq
    %v1660 = vshrl.u32 %v1659, 7
    %v1661 = vsub.s32 1, %v1660
    %v1662 = vrot.slane %v1646, %v1661
    %v1663 = vcombine.low %v1650, %v1654
    %v1664 = vcombine.low %v1658, %v1662
    %v1667 = vmul.f32 %v71, %v1663
    %v1668 = vmul.f32 %v72, %v1664
    %1669 = vst [vmem:[%s6] sm:$0xff] %v1667
    %1670 = vst [vmem:[%s6 + $0x8] sm:$0xff] %v1668
    // Predicated region
    $region42: #{self_attention_pallas.1} parent=1 // pred_check
      _
    $region43: #{self_attention_pallas.1} parent=1 // pred_check_branch
      %1672 = sbr.rel (0) target = $region45
    $region44: #{self_attention_pallas.1} parent=1 // pred_region
      _
    $region45: #{self_attention_pallas.1} parent=1 // pred_fallthru
      _
    // Predicated region
    $region46: #{self_attention_pallas.1} parent=1 // pred_check
      _
    $region47: #{self_attention_pallas.1} parent=1 // pred_check_branch
      %1674 = sbr.rel (0) target = $region49
    $region48: #{self_attention_pallas.1} parent=1 // pred_region
      _
    $region49: #{self_attention_pallas.1} parent=1 // pred_fallthru
      _
    %1675 = vsyncpa [#allocation3], 1
    %1676 = vsyncpa [#allocation5], 1
    %1677 = vsyncpa [#allocation8], 1

</llo_original>
